<compile_context>
chip_gen: v5e
topology: v5e:2x2
jax: 0.10.0
libtpu: 0.0.40
codegen_flags: <defaults>
</compile_context>

<pallas_src>
import functools

import jax
import jax.numpy as jnp
from jax.experimental import pallas as pl
from jax.experimental.pallas import tpu as pltpu

EPS = 1e-5  # nn.BatchNorm2d default eps


# ----------------------------- Pallas kernels -----------------------------

def _act(x, kind):
    if kind == "ReLU":
        return jnp.maximum(x, 0.0)
    return jnp.tanh(x)


def _conv_act_bn(p_ref, w_ref, b_ref, g_ref, beta_ref, a_ref, *, activation, batch):
    """Conv (as matmul) + bias + activation, writes pre-BN activation to a_ref,
    computes training-mode BatchNorm stats over (batch, spatial).

    p_ref:  [B, K, S]   im2col patches (K = Cin*kh*kw, S = Ho*Wo)
    w_ref:  [C, K]      conv weight, rows = out channels
    b_ref / g_ref / beta_ref: [C, 1]
    a_ref:  [B, C, S]   pre-BN activation output
    Returns (per-batch activations, BN scale [C,1], BN shift [C,1]).
    """
    w = w_ref[...]
    bias = b_ref[...]
    s = p_ref.shape[2]
    inv_n = 1.0 / float(batch * s)

    ys = []
    for bi in range(batch):  # static unroll, B is tiny
        acc = jnp.dot(w, p_ref[bi], preferred_element_type=jnp.float32) + bias
        y = _act(acc, activation)                       # [C, S]
        a_ref[bi] = y
        ys.append(y)

    total = ys[0]
    for y in ys[1:]:
        total = total + y
    mean = jnp.sum(total, axis=1, keepdims=True) * inv_n          # [C, 1]
    sq = (ys[0] - mean) ** 2
    for y in ys[1:]:
        sq = sq + (y - mean) ** 2
    var = jnp.sum(sq, axis=1, keepdims=True) * inv_n              # biased variance
    scale = jax.lax.rsqrt(var + EPS) * g_ref[...]                 # [C, 1]
    shift = beta_ref[...] - mean * scale                          # [C, 1]
    return ys, scale, shift


def conv_bn_kernel(p_ref, w_ref, b_ref, g_ref, beta_ref, a_ref, bn_ref,
                   *, activation, batch):
    ys, scale, shift = _conv_act_bn(p_ref, w_ref, b_ref, g_ref, beta_ref, a_ref,
                                    activation=activation, batch=batch)
    for bi in range(batch):
        bn_ref[bi] = ys[bi] * scale + shift


def conv_bn_head_kernel(p_ref, w_ref, b_ref, g_ref, beta_ref, wl_ref, bl_ref,
                        a_ref, logit_ref, *, activation, batch):
    ys, scale, shift = _conv_act_bn(p_ref, w_ref, b_ref, g_ref, beta_ref, a_ref,
                                    activation=activation, batch=batch)
    # AdaptiveAvgPool2d(1): per-sample mean over spatial lanes of the BN output.
    cols = []
    for bi in range(batch):
        bn_b = ys[bi] * scale + shift                             # [C, S]
        cols.append(jnp.mean(bn_b, axis=1, keepdims=True))        # [C, 1]
    pooled = jnp.concatenate(cols, axis=1).T                      # [B, C]
    # Linear(C -> 8)
    logit_ref[...] = (jnp.dot(pooled, wl_ref[...], preferred_element_type=jnp.float32)
                      + bl_ref[...])


# ----------------------------- pallas_call wrappers -----------------------------

def _vmem():
    return pl.BlockSpec(memory_space=pltpu.MemorySpace.VMEM)


def conv_bn_layer(p, w_mat, bias, gamma, beta, activation):
    B, _, S = p.shape
    C = w_mat.shape[0]
    return pl.pallas_call(
        functools.partial(conv_bn_kernel, activation=activation, batch=B),
        out_shape=(jax.ShapeDtypeStruct((B, C, S), jnp.float32),   # pre-BN act (a_i)
                   jax.ShapeDtypeStruct((B, C, S), jnp.float32)),  # BN output
        in_specs=[_vmem()] * 5,
        out_specs=(_vmem(), _vmem()),
    )(p, w_mat, bias, gamma, beta)


def conv_bn_head_layer(p, w_mat, bias, gamma, beta, wl, bl, activation):
    B, _, S = p.shape
    C = w_mat.shape[0]
    n_out = wl.shape[1]
    return pl.pallas_call(
        functools.partial(conv_bn_head_kernel, activation=activation, batch=B),
        out_shape=(jax.ShapeDtypeStruct((B, C, S), jnp.float32),     # a4
                   jax.ShapeDtypeStruct((B, n_out), jnp.float32)),   # logits
        in_specs=[_vmem()] * 7,
        out_specs=(_vmem(), _vmem()),
    )(p, w_mat, bias, gamma, beta, wl, bl)


# ----------------------------- glue (patches, params) -----------------------------

def extract_patches(x_nchw, kh, kw, stride, pad):
    """im2col as a single XLA op.  Returns [B, Cin*kh*kw, Ho*Wo], K ordered
    (cin, kh, kw) — matching weight.reshape(Cout, -1)."""
    B = x_nchw.shape[0]
    patches = jax.lax.conv_general_dilated_patches(
        x_nchw,
        filter_shape=(kh, kw),
        window_strides=(stride, stride),
        padding=((pad, pad), (pad, pad)),
        dimension_numbers=("NCHW", "OIHW", "NCHW"),
        precision=jax.lax.Precision.HIGHEST,   # exact gather (identity kernel)
    )                                          # [B, Cin*kh*kw, Ho, Wo]
    _, K, Ho, Wo = patches.shape
    return patches.reshape(B, K, Ho * Wo), Ho, Wo


def init_params(key):
    ks = jax.random.split(key, 10)

    def conv_init(kw_, kb_, cout, cin, kh, kwid):
        fan_in = cin * kh * kwid
        bound = 1.0 / (fan_in ** 0.5)
        w = jax.random.uniform(kw_, (cout, cin, kh, kwid), jnp.float32, -bound, bound)
        b = jax.random.uniform(kb_, (cout,), jnp.float32, -bound, bound)
        return w, b

    p = {}
    p["w1"], p["b1"] = conv_init(ks[0], ks[1], 4, 1, 8, 8)
    p["w2"], p["b2"] = conv_init(ks[2], ks[3], 16, 4, 3, 3)
    p["w3"], p["b3"] = conv_init(ks[4], ks[5], 32, 16, 3, 3)
    p["w4"], p["b4"] = conv_init(ks[6], ks[7], 64, 32, 3, 3)
    # BatchNorm2d default init: weight=1, bias=0
    for i, c in zip(range(1, 5), (4, 16, 32, 64)):
        p[f"g{i}"] = jnp.ones((c,), jnp.float32)
        p[f"be{i}"] = jnp.zeros((c,), jnp.float32)
    # Linear(64 -> 8)
    bound = 1.0 / (64.0 ** 0.5)
    p["wl"] = jax.random.uniform(ks[8], (8, 64), jnp.float32, -bound, bound)
    p["bl"] = jax.random.uniform(ks[9], (8,), jnp.float32, -bound, bound)
    return p


# ----------------------------- forward -----------------------------

LAYERS = (
    ("1", 8, 8, 4, 2),   # Conv2d(1, 4, 8x8, stride 4, pad 2)
    ("2", 3, 3, 2, 1),   # Conv2d(4, 16, 3x3, stride 2, pad 1)
    ("3", 3, 3, 2, 1),   # Conv2d(16, 32, 3x3, stride 2, pad 1)
    ("4", 3, 3, 2, 1),   # Conv2d(32, 64, 3x3, stride 2, pad 1)
)


def forward(x, params, activation="ReLU"):
    B = x.shape[0]
    acts = []
    logits = None
    cur = x                                                       # NCHW
    for li, (name, kh, kw, stride, pad) in enumerate(LAYERS):
        w = params[f"w{name}"]
        cout = w.shape[0]
        w_mat = w.reshape(cout, -1)                               # [Cout, Cin*kh*kw]
        bias = params[f"b{name}"].reshape(cout, 1)
        gamma = params[f"g{name}"].reshape(cout, 1)
        beta = params[f"be{name}"].reshape(cout, 1)
        p, Ho, Wo = extract_patches(cur, kh, kw, stride, pad)     # [B, K, S]
        if li < len(LAYERS) - 1:
            a, bn = conv_bn_layer(p, w_mat, bias, gamma, beta, activation)
            acts.append(a)                                        # a_i: [B, C, H*W]
            cur = bn.reshape(B, cout, Ho, Wo)                     # NCHW, no transpose
        else:
            a, logits = conv_bn_head_layer(
                p, w_mat, bias, gamma, beta,
                params["wl"].T, params["bl"].reshape(1, -1), activation)
            acts.append(a)
    return (logits, acts[0], acts[1], acts[2], acts[3])


if __name__ == "__main__":
    key = jax.random.PRNGKey(0)
    k_param, k_x = jax.random.split(key)
    params = init_params(k_param)
    x = jax.random.normal(k_x, (2, 1, 64, 64), jnp.float32)   # NCHW, Conv2d(1, ...)

    fwd = jax.jit(functools.partial(forward, activation="ReLU"))
    out, a1, a2, a3, a4 = fwd(x, params)
    jax.block_until_ready((out, a1, a2, a3, a4))

    assert out.shape == (2, 8)
    assert a1.shape == (2, 4, 256)
    assert a2.shape == (2, 16, 64)
    assert a3.shape == (2, 32, 16)
    assert a4.shape == (2, 64, 4)
    print("KERNEL_OK")
</pallas_src>

<mosaic_0001>
module attributes {stable_mosaic.version = 11 : i64} {
  func.func @conv_bn_kernel(%arg0: memref<2x64x256xf32, #tpu.memory_space<vmem>>, %arg1: memref<4x64xf32, #tpu.memory_space<vmem>>, %arg2: memref<4x1xf32, #tpu.memory_space<vmem>>, %arg3: memref<4x1xf32, #tpu.memory_space<vmem>>, %arg4: memref<4x1xf32, #tpu.memory_space<vmem>>, %arg5: memref<2x4x256xf32, #tpu.memory_space<vmem>>, %arg6: memref<2x4x256xf32, #tpu.memory_space<vmem>>) attributes {dimension_semantics = [], scalar_prefetch = 0 : i64, scratch_operands = 0 : i64, tpu.core_type = #tpu.core_type<tc>} {
    %c0 = arith.constant 0 : index
    %c0_0 = arith.constant 0 : index
    %0 = vector.load %arg1[%c0, %c0_0] : memref<4x64xf32, #tpu.memory_space<vmem>>, vector<4x64xf32>
    %c0_1 = arith.constant 0 : index
    %c0_2 = arith.constant 0 : index
    %1 = vector.load %arg2[%c0_1, %c0_2] : memref<4x1xf32, #tpu.memory_space<vmem>>, vector<4x1xf32>
    %c0_3 = arith.constant 0 : index
    %c0_4 = arith.constant 0 : index
    %c0_5 = arith.constant 0 : index
    %2 = vector.load %arg0[%c0_3, %c0_4, %c0_5] : memref<2x64x256xf32, #tpu.memory_space<vmem>>, vector<1x64x256xf32>
    %3 = vector.shape_cast %2 : vector<1x64x256xf32> to vector<64x256xf32>
    %cst = arith.constant dense<0.000000e+00> : vector<4x256xf32>
    %4 = tpu.matmul %0, %3, %cst {dimension_numbers = #tpu.dot_dimension_numbers<[1], [0], [0], [1], [0, 0, 1, 1], [], []>} : vector<4x64xf32>, vector<64x256xf32>, vector<4x256xf32> -> vector<4x256xf32>
    %5 = vector.broadcast %1 : vector<4x1xf32> to vector<4x256xf32>
    %6 = arith.addf %4, %5 : vector<4x256xf32>
    %cst_6 = arith.constant 0.000000e+00 : f32
    %7 = vector.broadcast %cst_6 : f32 to vector<4x256xf32>
    %8 = arith.maximumf %6, %7 : vector<4x256xf32>
    %c0_7 = arith.constant 0 : index
    %c0_8 = arith.constant 0 : index
    %c0_9 = arith.constant 0 : index
    %9 = vector.load %arg5[%c0_7, %c0_8, %c0_9] : memref<2x4x256xf32, #tpu.memory_space<vmem>>, vector<1x4x256xf32>
    %10 = vector.shape_cast %9 : vector<1x4x256xf32> to vector<4x256xf32>
    %11 = vector.shape_cast %8 : vector<4x256xf32> to vector<1x4x256xf32>
    tpu.vector_store %arg5[%c0_7, %c0_8, %c0_9], %11 {strides = array<i32>} : memref<2x4x256xf32, #tpu.memory_space<vmem>>, vector<1x4x256xf32>,
    %c1 = arith.constant 1 : index
    %c0_10 = arith.constant 0 : index
    %c0_11 = arith.constant 0 : index
    %12 = vector.load %arg0[%c1, %c0_10, %c0_11] : memref<2x64x256xf32, #tpu.memory_space<vmem>>, vector<1x64x256xf32>
    %13 = vector.shape_cast %12 : vector<1x64x256xf32> to vector<64x256xf32>
    %cst_12 = arith.constant dense<0.000000e+00> : vector<4x256xf32>
    %14 = tpu.matmul %0, %13, %cst_12 {dimension_numbers = #tpu.dot_dimension_numbers<[1], [0], [0], [1], [0, 0, 1, 1], [], []>} : vector<4x64xf32>, vector<64x256xf32>, vector<4x256xf32> -> vector<4x256xf32>
    %15 = vector.broadcast %1 : vector<4x1xf32> to vector<4x256xf32>
    %16 = arith.addf %14, %15 : vector<4x256xf32>
    %cst_13 = arith.constant 0.000000e+00 : f32
    %17 = vector.broadcast %cst_13 : f32 to vector<4x256xf32>
    %18 = arith.maximumf %16, %17 : vector<4x256xf32>
    %c1_14 = arith.constant 1 : index
    %c0_15 = arith.constant 0 : index
    %c0_16 = arith.constant 0 : index
    %19 = vector.load %arg5[%c1_14, %c0_15, %c0_16] : memref<2x4x256xf32, #tpu.memory_space<vmem>>, vector<1x4x256xf32>
    %20 = vector.shape_cast %19 : vector<1x4x256xf32> to vector<4x256xf32>
    %21 = vector.shape_cast %18 : vector<4x256xf32> to vector<1x4x256xf32>
    tpu.vector_store %arg5[%c1_14, %c0_15, %c0_16], %21 {strides = array<i32>} : memref<2x4x256xf32, #tpu.memory_space<vmem>>, vector<1x4x256xf32>,
    %22 = arith.addf %8, %18 : vector<4x256xf32>
    %cst_17 = arith.constant dense<0.000000e+00> : vector<4xf32>
    %23 = vector.multi_reduction <add>, %22, %cst_17 [1] : vector<4x256xf32> to vector<4xf32>
    %24 = vector.shape_cast %23 : vector<4xf32> to vector<4x1xf32>
    %cst_18 = arith.constant 0.001953125 : f32
    %25 = vector.broadcast %cst_18 : f32 to vector<4x1xf32>
    %26 = arith.mulf %24, %25 : vector<4x1xf32>
    %27 = vector.broadcast %26 : vector<4x1xf32> to vector<4x256xf32>
    %28 = arith.subf %8, %27 : vector<4x256xf32>
    %29 = arith.mulf %28, %28 : vector<4x256xf32>
    %30 = vector.broadcast %26 : vector<4x1xf32> to vector<4x256xf32>
    %31 = arith.subf %18, %30 : vector<4x256xf32>
    %32 = arith.mulf %31, %31 : vector<4x256xf32>
    %33 = arith.addf %29, %32 : vector<4x256xf32>
    %cst_19 = arith.constant dense<0.000000e+00> : vector<4xf32>
    %34 = vector.multi_reduction <add>, %33, %cst_19 [1] : vector<4x256xf32> to vector<4xf32>
    %35 = vector.shape_cast %34 : vector<4xf32> to vector<4x1xf32>
    %cst_20 = arith.constant 0.001953125 : f32
    %36 = vector.broadcast %cst_20 : f32 to vector<4x1xf32>
    %37 = arith.mulf %35, %36 : vector<4x1xf32>
    %cst_21 = arith.constant 9.99999974E-6 : f32
    %38 = vector.broadcast %cst_21 : f32 to vector<4x1xf32>
    %39 = arith.addf %37, %38 : vector<4x1xf32>
    %40 = math.rsqrt %39 : vector<4x1xf32>
    %c0_22 = arith.constant 0 : index
    %c0_23 = arith.constant 0 : index
    %41 = vector.load %arg3[%c0_22, %c0_23] : memref<4x1xf32, #tpu.memory_space<vmem>>, vector<4x1xf32>
    %42 = arith.mulf %40, %41 : vector<4x1xf32>
    %c0_24 = arith.constant 0 : index
    %c0_25 = arith.constant 0 : index
    %43 = vector.load %arg4[%c0_24, %c0_25] : memref<4x1xf32, #tpu.memory_space<vmem>>, vector<4x1xf32>
    %44 = arith.mulf %26, %42 : vector<4x1xf32>
    %45 = arith.subf %43, %44 : vector<4x1xf32>
    %46 = vector.broadcast %42 : vector<4x1xf32> to vector<4x256xf32>
    %47 = arith.mulf %8, %46 : vector<4x256xf32>
    %48 = vector.broadcast %45 : vector<4x1xf32> to vector<4x256xf32>
    %49 = arith.addf %47, %48 : vector<4x256xf32>
    %c0_26 = arith.constant 0 : index
    %c0_27 = arith.constant 0 : index
    %c0_28 = arith.constant 0 : index
    %50 = vector.load %arg6[%c0_26, %c0_27, %c0_28] : memref<2x4x256xf32, #tpu.memory_space<vmem>>, vector<1x4x256xf32>
    %51 = vector.shape_cast %50 : vector<1x4x256xf32> to vector<4x256xf32>
    %52 = vector.shape_cast %49 : vector<4x256xf32> to vector<1x4x256xf32>
    tpu.vector_store %arg6[%c0_26, %c0_27, %c0_28], %52 {strides = array<i32>} : memref<2x4x256xf32, #tpu.memory_space<vmem>>, vector<1x4x256xf32>,
    %53 = vector.broadcast %42 : vector<4x1xf32> to vector<4x256xf32>
    %54 = arith.mulf %18, %53 : vector<4x256xf32>
    %55 = vector.broadcast %45 : vector<4x1xf32> to vector<4x256xf32>
    %56 = arith.addf %54, %55 : vector<4x256xf32>
    %c1_29 = arith.constant 1 : index
    %c0_30 = arith.constant 0 : index
    %c0_31 = arith.constant 0 : index
    %57 = vector.load %arg6[%c1_29, %c0_30, %c0_31] : memref<2x4x256xf32, #tpu.memory_space<vmem>>, vector<1x4x256xf32>
    %58 = vector.shape_cast %57 : vector<1x4x256xf32> to vector<4x256xf32>
    %59 = vector.shape_cast %56 : vector<4x256xf32> to vector<1x4x256xf32>
    tpu.vector_store %arg6[%c1_29, %c0_30, %c0_31], %59 {strides = array<i32>} : memref<2x4x256xf32, #tpu.memory_space<vmem>>, vector<1x4x256xf32>,
    return
  }
}

module attributes {stable_mosaic.version = 11 : i64} {
  func.func @conv_bn_kernel(%arg0: memref<2x36x64xf32, #tpu.memory_space<vmem>>, %arg1: memref<16x36xf32, #tpu.memory_space<vmem>>, %arg2: memref<16x1xf32, #tpu.memory_space<vmem>>, %arg3: memref<16x1xf32, #tpu.memory_space<vmem>>, %arg4: memref<16x1xf32, #tpu.memory_space<vmem>>, %arg5: memref<2x16x64xf32, #tpu.memory_space<vmem>>, %arg6: memref<2x16x64xf32, #tpu.memory_space<vmem>>) attributes {dimension_semantics = [], scalar_prefetch = 0 : i64, scratch_operands = 0 : i64, tpu.core_type = #tpu.core_type<tc>} {
    %c0 = arith.constant 0 : index
    %c0_0 = arith.constant 0 : index
    %0 = vector.load %arg1[%c0, %c0_0] : memref<16x36xf32, #tpu.memory_space<vmem>>, vector<16x36xf32>
    %c0_1 = arith.constant 0 : index
    %c0_2 = arith.constant 0 : index
    %1 = vector.load %arg2[%c0_1, %c0_2] : memref<16x1xf32, #tpu.memory_space<vmem>>, vector<16x1xf32>
    %c0_3 = arith.constant 0 : index
    %c0_4 = arith.constant 0 : index
    %c0_5 = arith.constant 0 : index
    %2 = vector.load %arg0[%c0_3, %c0_4, %c0_5] : memref<2x36x64xf32, #tpu.memory_space<vmem>>, vector<1x36x64xf32>
    %3 = vector.shape_cast %2 : vector<1x36x64xf32> to vector<36x64xf32>
    %cst = arith.constant dense<0.000000e+00> : vector<16x64xf32>
    %4 = tpu.matmul %0, %3, %cst {dimension_numbers = #tpu.dot_dimension_numbers<[1], [0], [0], [1], [0, 0, 1, 1], [], []>} : vector<16x36xf32>, vector<36x64xf32>, vector<16x64xf32> -> vector<16x64xf32>
    %5 = vector.broadcast %1 : vector<16x1xf32> to vector<16x64xf32>
    %6 = arith.addf %4, %5 : vector<16x64xf32>
    %cst_6 = arith.constant 0.000000e+00 : f32
    %7 = vector.broadcast %cst_6 : f32 to vector<16x64xf32>
    %8 = arith.maximumf %6, %7 : vector<16x64xf32>
    %c0_7 = arith.constant 0 : index
    %c0_8 = arith.constant 0 : index
    %c0_9 = arith.constant 0 : index
    %9 = vector.load %arg5[%c0_7, %c0_8, %c0_9] : memref<2x16x64xf32, #tpu.memory_space<vmem>>, vector<1x16x64xf32>
    %10 = vector.shape_cast %9 : vector<1x16x64xf32> to vector<16x64xf32>
    %11 = vector.shape_cast %8 : vector<16x64xf32> to vector<1x16x64xf32>
    tpu.vector_store %arg5[%c0_7, %c0_8, %c0_9], %11 {strides = array<i32>} : memref<2x16x64xf32, #tpu.memory_space<vmem>>, vector<1x16x64xf32>,
    %c1 = arith.constant 1 : index
    %c0_10 = arith.constant 0 : index
    %c0_11 = arith.constant 0 : index
    %12 = vector.load %arg0[%c1, %c0_10, %c0_11] : memref<2x36x64xf32, #tpu.memory_space<vmem>>, vector<1x36x64xf32>
    %13 = vector.shape_cast %12 : vector<1x36x64xf32> to vector<36x64xf32>
    %cst_12 = arith.constant dense<0.000000e+00> : vector<16x64xf32>
    %14 = tpu.matmul %0, %13, %cst_12 {dimension_numbers = #tpu.dot_dimension_numbers<[1], [0], [0], [1], [0, 0, 1, 1], [], []>} : vector<16x36xf32>, vector<36x64xf32>, vector<16x64xf32> -> vector<16x64xf32>
    %15 = vector.broadcast %1 : vector<16x1xf32> to vector<16x64xf32>
    %16 = arith.addf %14, %15 : vector<16x64xf32>
    %cst_13 = arith.constant 0.000000e+00 : f32
    %17 = vector.broadcast %cst_13 : f32 to vector<16x64xf32>
    %18 = arith.maximumf %16, %17 : vector<16x64xf32>
    %c1_14 = arith.constant 1 : index
    %c0_15 = arith.constant 0 : index
    %c0_16 = arith.constant 0 : index
    %19 = vector.load %arg5[%c1_14, %c0_15, %c0_16] : memref<2x16x64xf32, #tpu.memory_space<vmem>>, vector<1x16x64xf32>
    %20 = vector.shape_cast %19 : vector<1x16x64xf32> to vector<16x64xf32>
    %21 = vector.shape_cast %18 : vector<16x64xf32> to vector<1x16x64xf32>
    tpu.vector_store %arg5[%c1_14, %c0_15, %c0_16], %21 {strides = array<i32>} : memref<2x16x64xf32, #tpu.memory_space<vmem>>, vector<1x16x64xf32>,
    %22 = arith.addf %8, %18 : vector<16x64xf32>
    %cst_17 = arith.constant dense<0.000000e+00> : vector<16xf32>
    %23 = vector.multi_reduction <add>, %22, %cst_17 [1] : vector<16x64xf32> to vector<16xf32>
    %24 = vector.shape_cast %23 : vector<16xf32> to vector<16x1xf32>
    %cst_18 = arith.constant 7.812500e-03 : f32
    %25 = vector.broadcast %cst_18 : f32 to vector<16x1xf32>
    %26 = arith.mulf %24, %25 : vector<16x1xf32>
    %27 = vector.broadcast %26 : vector<16x1xf32> to vector<16x64xf32>
    %28 = arith.subf %8, %27 : vector<16x64xf32>
    %29 = arith.mulf %28, %28 : vector<16x64xf32>
    %30 = vector.broadcast %26 : vector<16x1xf32> to vector<16x64xf32>
    %31 = arith.subf %18, %30 : vector<16x64xf32>
    %32 = arith.mulf %31, %31 : vector<16x64xf32>
    %33 = arith.addf %29, %32 : vector<16x64xf32>
    %cst_19 = arith.constant dense<0.000000e+00> : vector<16xf32>
    %34 = vector.multi_reduction <add>, %33, %cst_19 [1] : vector<16x64xf32> to vector<16xf32>
    %35 = vector.shape_cast %34 : vector<16xf32> to vector<16x1xf32>
    %cst_20 = arith.constant 7.812500e-03 : f32
    %36 = vector.broadcast %cst_20 : f32 to vector<16x1xf32>
    %37 = arith.mulf %35, %36 : vector<16x1xf32>
    %cst_21 = arith.constant 9.99999974E-6 : f32
    %38 = vector.broadcast %cst_21 : f32 to vector<16x1xf32>
    %39 = arith.addf %37, %38 : vector<16x1xf32>
    %40 = math.rsqrt %39 : vector<16x1xf32>
    %c0_22 = arith.constant 0 : index
    %c0_23 = arith.constant 0 : index
    %41 = vector.load %arg3[%c0_22, %c0_23] : memref<16x1xf32, #tpu.memory_space<vmem>>, vector<16x1xf32>
    %42 = arith.mulf %40, %41 : vector<16x1xf32>
    %c0_24 = arith.constant 0 : index
    %c0_25 = arith.constant 0 : index
    %43 = vector.load %arg4[%c0_24, %c0_25] : memref<16x1xf32, #tpu.memory_space<vmem>>, vector<16x1xf32>
    %44 = arith.mulf %26, %42 : vector<16x1xf32>
    %45 = arith.subf %43, %44 : vector<16x1xf32>
    %46 = vector.broadcast %42 : vector<16x1xf32> to vector<16x64xf32>
    %47 = arith.mulf %8, %46 : vector<16x64xf32>
    %48 = vector.broadcast %45 : vector<16x1xf32> to vector<16x64xf32>
    %49 = arith.addf %47, %48 : vector<16x64xf32>
    %c0_26 = arith.constant 0 : index
    %c0_27 = arith.constant 0 : index
    %c0_28 = arith.constant 0 : index
    %50 = vector.load %arg6[%c0_26, %c0_27, %c0_28] : memref<2x16x64xf32, #tpu.memory_space<vmem>>, vector<1x16x64xf32>
    %51 = vector.shape_cast %50 : vector<1x16x64xf32> to vector<16x64xf32>
    %52 = vector.shape_cast %49 : vector<16x64xf32> to vector<1x16x64xf32>
    tpu.vector_store %arg6[%c0_26, %c0_27, %c0_28], %52 {strides = array<i32>} : memref<2x16x64xf32, #tpu.memory_space<vmem>>, vector<1x16x64xf32>,
    %53 = vector.broadcast %42 : vector<16x1xf32> to vector<16x64xf32>
    %54 = arith.mulf %18, %53 : vector<16x64xf32>
    %55 = vector.broadcast %45 : vector<16x1xf32> to vector<16x64xf32>
    %56 = arith.addf %54, %55 : vector<16x64xf32>
    %c1_29 = arith.constant 1 : index
    %c0_30 = arith.constant 0 : index
    %c0_31 = arith.constant 0 : index
    %57 = vector.load %arg6[%c1_29, %c0_30, %c0_31] : memref<2x16x64xf32, #tpu.memory_space<vmem>>, vector<1x16x64xf32>
    %58 = vector.shape_cast %57 : vector<1x16x64xf32> to vector<16x64xf32>
    %59 = vector.shape_cast %56 : vector<16x64xf32> to vector<1x16x64xf32>
    tpu.vector_store %arg6[%c1_29, %c0_30, %c0_31], %59 {strides = array<i32>} : memref<2x16x64xf32, #tpu.memory_space<vmem>>, vector<1x16x64xf32>,
    return
  }
}

module attributes {stable_mosaic.version = 11 : i64} {
  func.func @conv_bn_kernel(%arg0: memref<2x144x16xf32, #tpu.memory_space<vmem>>, %arg1: memref<32x144xf32, #tpu.memory_space<vmem>>, %arg2: memref<32x1xf32, #tpu.memory_space<vmem>>, %arg3: memref<32x1xf32, #tpu.memory_space<vmem>>, %arg4: memref<32x1xf32, #tpu.memory_space<vmem>>, %arg5: memref<2x32x16xf32, #tpu.memory_space<vmem>>, %arg6: memref<2x32x16xf32, #tpu.memory_space<vmem>>) attributes {dimension_semantics = [], scalar_prefetch = 0 : i64, scratch_operands = 0 : i64, tpu.core_type = #tpu.core_type<tc>} {
    %c0 = arith.constant 0 : index
    %c0_0 = arith.constant 0 : index
    %0 = vector.load %arg1[%c0, %c0_0] : memref<32x144xf32, #tpu.memory_space<vmem>>, vector<32x144xf32>
    %c0_1 = arith.constant 0 : index
    %c0_2 = arith.constant 0 : index
    %1 = vector.load %arg2[%c0_1, %c0_2] : memref<32x1xf32, #tpu.memory_space<vmem>>, vector<32x1xf32>
    %c0_3 = arith.constant 0 : index
    %c0_4 = arith.constant 0 : index
    %c0_5 = arith.constant 0 : index
    %2 = vector.load %arg0[%c0_3, %c0_4, %c0_5] : memref<2x144x16xf32, #tpu.memory_space<vmem>>, vector<1x144x16xf32>
    %3 = vector.shape_cast %2 : vector<1x144x16xf32> to vector<144x16xf32>
    %cst = arith.constant dense<0.000000e+00> : vector<32x16xf32>
    %4 = tpu.matmul %0, %3, %cst {dimension_numbers = #tpu.dot_dimension_numbers<[1], [0], [0], [1], [0, 0, 1, 1], [], []>} : vector<32x144xf32>, vector<144x16xf32>, vector<32x16xf32> -> vector<32x16xf32>
    %5 = vector.broadcast %1 : vector<32x1xf32> to vector<32x16xf32>
    %6 = arith.addf %4, %5 : vector<32x16xf32>
    %cst_6 = arith.constant 0.000000e+00 : f32
    %7 = vector.broadcast %cst_6 : f32 to vector<32x16xf32>
    %8 = arith.maximumf %6, %7 : vector<32x16xf32>
    %c0_7 = arith.constant 0 : index
    %c0_8 = arith.constant 0 : index
    %c0_9 = arith.constant 0 : index
    %9 = vector.load %arg5[%c0_7, %c0_8, %c0_9] : memref<2x32x16xf32, #tpu.memory_space<vmem>>, vector<1x32x16xf32>
    %10 = vector.shape_cast %9 : vector<1x32x16xf32> to vector<32x16xf32>
    %11 = vector.shape_cast %8 : vector<32x16xf32> to vector<1x32x16xf32>
    tpu.vector_store %arg5[%c0_7, %c0_8, %c0_9], %11 {strides = array<i32>} : memref<2x32x16xf32, #tpu.memory_space<vmem>>, vector<1x32x16xf32>,
    %c1 = arith.constant 1 : index
    %c0_10 = arith.constant 0 : index
    %c0_11 = arith.constant 0 : index
    %12 = vector.load %arg0[%c1, %c0_10, %c0_11] : memref<2x144x16xf32, #tpu.memory_space<vmem>>, vector<1x144x16xf32>
    %13 = vector.shape_cast %12 : vector<1x144x16xf32> to vector<144x16xf32>
    %cst_12 = arith.constant dense<0.000000e+00> : vector<32x16xf32>
    %14 = tpu.matmul %0, %13, %cst_12 {dimension_numbers = #tpu.dot_dimension_numbers<[1], [0], [0], [1], [0, 0, 1, 1], [], []>} : vector<32x144xf32>, vector<144x16xf32>, vector<32x16xf32> -> vector<32x16xf32>
    %15 = vector.broadcast %1 : vector<32x1xf32> to vector<32x16xf32>
    %16 = arith.addf %14, %15 : vector<32x16xf32>
    %cst_13 = arith.constant 0.000000e+00 : f32
    %17 = vector.broadcast %cst_13 : f32 to vector<32x16xf32>
    %18 = arith.maximumf %16, %17 : vector<32x16xf32>
    %c1_14 = arith.constant 1 : index
    %c0_15 = arith.constant 0 : index
    %c0_16 = arith.constant 0 : index
    %19 = vector.load %arg5[%c1_14, %c0_15, %c0_16] : memref<2x32x16xf32, #tpu.memory_space<vmem>>, vector<1x32x16xf32>
    %20 = vector.shape_cast %19 : vector<1x32x16xf32> to vector<32x16xf32>
    %21 = vector.shape_cast %18 : vector<32x16xf32> to vector<1x32x16xf32>
    tpu.vector_store %arg5[%c1_14, %c0_15, %c0_16], %21 {strides = array<i32>} : memref<2x32x16xf32, #tpu.memory_space<vmem>>, vector<1x32x16xf32>,
    %22 = arith.addf %8, %18 : vector<32x16xf32>
    %cst_17 = arith.constant dense<0.000000e+00> : vector<32xf32>
    %23 = vector.multi_reduction <add>, %22, %cst_17 [1] : vector<32x16xf32> to vector<32xf32>
    %24 = vector.shape_cast %23 : vector<32xf32> to vector<32x1xf32>
    %cst_18 = arith.constant 3.125000e-02 : f32
    %25 = vector.broadcast %cst_18 : f32 to vector<32x1xf32>
    %26 = arith.mulf %24, %25 : vector<32x1xf32>
    %27 = vector.broadcast %26 : vector<32x1xf32> to vector<32x16xf32>
    %28 = arith.subf %8, %27 : vector<32x16xf32>
    %29 = arith.mulf %28, %28 : vector<32x16xf32>
    %30 = vector.broadcast %26 : vector<32x1xf32> to vector<32x16xf32>
    %31 = arith.subf %18, %30 : vector<32x16xf32>
    %32 = arith.mulf %31, %31 : vector<32x16xf32>
    %33 = arith.addf %29, %32 : vector<32x16xf32>
    %cst_19 = arith.constant dense<0.000000e+00> : vector<32xf32>
    %34 = vector.multi_reduction <add>, %33, %cst_19 [1] : vector<32x16xf32> to vector<32xf32>
    %35 = vector.shape_cast %34 : vector<32xf32> to vector<32x1xf32>
    %cst_20 = arith.constant 3.125000e-02 : f32
    %36 = vector.broadcast %cst_20 : f32 to vector<32x1xf32>
    %37 = arith.mulf %35, %36 : vector<32x1xf32>
    %cst_21 = arith.constant 9.99999974E-6 : f32
    %38 = vector.broadcast %cst_21 : f32 to vector<32x1xf32>
    %39 = arith.addf %37, %38 : vector<32x1xf32>
    %40 = math.rsqrt %39 : vector<32x1xf32>
    %c0_22 = arith.constant 0 : index
    %c0_23 = arith.constant 0 : index
    %41 = vector.load %arg3[%c0_22, %c0_23] : memref<32x1xf32, #tpu.memory_space<vmem>>, vector<32x1xf32>
    %42 = arith.mulf %40, %41 : vector<32x1xf32>
    %c0_24 = arith.constant 0 : index
    %c0_25 = arith.constant 0 : index
    %43 = vector.load %arg4[%c0_24, %c0_25] : memref<32x1xf32, #tpu.memory_space<vmem>>, vector<32x1xf32>
    %44 = arith.mulf %26, %42 : vector<32x1xf32>
    %45 = arith.subf %43, %44 : vector<32x1xf32>
    %46 = vector.broadcast %42 : vector<32x1xf32> to vector<32x16xf32>
    %47 = arith.mulf %8, %46 : vector<32x16xf32>
    %48 = vector.broadcast %45 : vector<32x1xf32> to vector<32x16xf32>
    %49 = arith.addf %47, %48 : vector<32x16xf32>
    %c0_26 = arith.constant 0 : index
    %c0_27 = arith.constant 0 : index
    %c0_28 = arith.constant 0 : index
    %50 = vector.load %arg6[%c0_26, %c0_27, %c0_28] : memref<2x32x16xf32, #tpu.memory_space<vmem>>, vector<1x32x16xf32>
    %51 = vector.shape_cast %50 : vector<1x32x16xf32> to vector<32x16xf32>
    %52 = vector.shape_cast %49 : vector<32x16xf32> to vector<1x32x16xf32>
    tpu.vector_store %arg6[%c0_26, %c0_27, %c0_28], %52 {strides = array<i32>} : memref<2x32x16xf32, #tpu.memory_space<vmem>>, vector<1x32x16xf32>,
    %53 = vector.broadcast %42 : vector<32x1xf32> to vector<32x16xf32>
    %54 = arith.mulf %18, %53 : vector<32x16xf32>
    %55 = vector.broadcast %45 : vector<32x1xf32> to vector<32x16xf32>
    %56 = arith.addf %54, %55 : vector<32x16xf32>
    %c1_29 = arith.constant 1 : index
    %c0_30 = arith.constant 0 : index
    %c0_31 = arith.constant 0 : index
    %57 = vector.load %arg6[%c1_29, %c0_30, %c0_31] : memref<2x32x16xf32, #tpu.memory_space<vmem>>, vector<1x32x16xf32>
    %58 = vector.shape_cast %57 : vector<1x32x16xf32> to vector<32x16xf32>
    %59 = vector.shape_cast %56 : vector<32x16xf32> to vector<1x32x16xf32>
    tpu.vector_store %arg6[%c1_29, %c0_30, %c0_31], %59 {strides = array<i32>} : memref<2x32x16xf32, #tpu.memory_space<vmem>>, vector<1x32x16xf32>,
    return
  }
}

module attributes {stable_mosaic.version = 11 : i64} {
  func.func @conv_bn_head_kernel(%arg0: memref<2x288x4xf32, #tpu.memory_space<vmem>>, %arg1: memref<64x288xf32, #tpu.memory_space<vmem>>, %arg2: memref<64x1xf32, #tpu.memory_space<vmem>>, %arg3: memref<64x1xf32, #tpu.memory_space<vmem>>, %arg4: memref<64x1xf32, #tpu.memory_space<vmem>>, %arg5: memref<64x8xf32, #tpu.memory_space<vmem>>, %arg6: memref<1x8xf32, #tpu.memory_space<vmem>>, %arg7: memref<2x64x4xf32, #tpu.memory_space<vmem>>, %arg8: memref<2x8xf32, #tpu.memory_space<vmem>>) attributes {dimension_semantics = [], scalar_prefetch = 0 : i64, scratch_operands = 0 : i64, tpu.core_type = #tpu.core_type<tc>} {
    %c0 = arith.constant 0 : index
    %c0_0 = arith.constant 0 : index
    %0 = vector.load %arg1[%c0, %c0_0] : memref<64x288xf32, #tpu.memory_space<vmem>>, vector<64x288xf32>
    %c0_1 = arith.constant 0 : index
    %c0_2 = arith.constant 0 : index
    %1 = vector.load %arg2[%c0_1, %c0_2] : memref<64x1xf32, #tpu.memory_space<vmem>>, vector<64x1xf32>
    %c0_3 = arith.constant 0 : index
    %c0_4 = arith.constant 0 : index
    %c0_5 = arith.constant 0 : index
    %2 = vector.load %arg0[%c0_3, %c0_4, %c0_5] : memref<2x288x4xf32, #tpu.memory_space<vmem>>, vector<1x288x4xf32>
    %3 = vector.shape_cast %2 : vector<1x288x4xf32> to vector<288x4xf32>
    %cst = arith.constant dense<0.000000e+00> : vector<64x4xf32>
    %4 = tpu.matmul %0, %3, %cst {dimension_numbers = #tpu.dot_dimension_numbers<[1], [0], [0], [1], [0, 0, 1, 1], [], []>} : vector<64x288xf32>, vector<288x4xf32>, vector<64x4xf32> -> vector<64x4xf32>
    %5 = vector.broadcast %1 : vector<64x1xf32> to vector<64x4xf32>
    %6 = arith.addf %4, %5 : vector<64x4xf32>
    %cst_6 = arith.constant 0.000000e+00 : f32
    %7 = vector.broadcast %cst_6 : f32 to vector<64x4xf32>
    %8 = arith.maximumf %6, %7 : vector<64x4xf32>
    %c0_7 = arith.constant 0 : index
    %c0_8 = arith.constant 0 : index
    %c0_9 = arith.constant 0 : index
    %9 = vector.load %arg7[%c0_7, %c0_8, %c0_9] : memref<2x64x4xf32, #tpu.memory_space<vmem>>, vector<1x64x4xf32>
    %10 = vector.shape_cast %9 : vector<1x64x4xf32> to vector<64x4xf32>
    %11 = vector.shape_cast %8 : vector<64x4xf32> to vector<1x64x4xf32>
    tpu.vector_store %arg7[%c0_7, %c0_8, %c0_9], %11 {strides = array<i32>} : memref<2x64x4xf32, #tpu.memory_space<vmem>>, vector<1x64x4xf32>,
    %c1 = arith.constant 1 : index
    %c0_10 = arith.constant 0 : index
    %c0_11 = arith.constant 0 : index
    %12 = vector.load %arg0[%c1, %c0_10, %c0_11] : memref<2x288x4xf32, #tpu.memory_space<vmem>>, vector<1x288x4xf32>
    %13 = vector.shape_cast %12 : vector<1x288x4xf32> to vector<288x4xf32>
    %cst_12 = arith.constant dense<0.000000e+00> : vector<64x4xf32>
    %14 = tpu.matmul %0, %13, %cst_12 {dimension_numbers = #tpu.dot_dimension_numbers<[1], [0], [0], [1], [0, 0, 1, 1], [], []>} : vector<64x288xf32>, vector<288x4xf32>, vector<64x4xf32> -> vector<64x4xf32>
    %15 = vector.broadcast %1 : vector<64x1xf32> to vector<64x4xf32>
    %16 = arith.addf %14, %15 : vector<64x4xf32>
    %cst_13 = arith.constant 0.000000e+00 : f32
    %17 = vector.broadcast %cst_13 : f32 to vector<64x4xf32>
    %18 = arith.maximumf %16, %17 : vector<64x4xf32>
    %c1_14 = arith.constant 1 : index
    %c0_15 = arith.constant 0 : index
    %c0_16 = arith.constant 0 : index
    %19 = vector.load %arg7[%c1_14, %c0_15, %c0_16] : memref<2x64x4xf32, #tpu.memory_space<vmem>>, vector<1x64x4xf32>
    %20 = vector.shape_cast %19 : vector<1x64x4xf32> to vector<64x4xf32>
    %21 = vector.shape_cast %18 : vector<64x4xf32> to vector<1x64x4xf32>
    tpu.vector_store %arg7[%c1_14, %c0_15, %c0_16], %21 {strides = array<i32>} : memref<2x64x4xf32, #tpu.memory_space<vmem>>, vector<1x64x4xf32>,
    %22 = arith.addf %8, %18 : vector<64x4xf32>
    %cst_17 = arith.constant dense<0.000000e+00> : vector<64xf32>
    %23 = vector.multi_reduction <add>, %22, %cst_17 [1] : vector<64x4xf32> to vector<64xf32>
    %24 = vector.shape_cast %23 : vector<64xf32> to vector<64x1xf32>
    %cst_18 = arith.constant 1.250000e-01 : f32
    %25 = vector.broadcast %cst_18 : f32 to vector<64x1xf32>
    %26 = arith.mulf %24, %25 : vector<64x1xf32>
    %27 = vector.broadcast %26 : vector<64x1xf32> to vector<64x4xf32>
    %28 = arith.subf %8, %27 : vector<64x4xf32>
    %29 = arith.mulf %28, %28 : vector<64x4xf32>
    %30 = vector.broadcast %26 : vector<64x1xf32> to vector<64x4xf32>
    %31 = arith.subf %18, %30 : vector<64x4xf32>
    %32 = arith.mulf %31, %31 : vector<64x4xf32>
    %33 = arith.addf %29, %32 : vector<64x4xf32>
    %cst_19 = arith.constant dense<0.000000e+00> : vector<64xf32>
    %34 = vector.multi_reduction <add>, %33, %cst_19 [1] : vector<64x4xf32> to vector<64xf32>
    %35 = vector.shape_cast %34 : vector<64xf32> to vector<64x1xf32>
    %cst_20 = arith.constant 1.250000e-01 : f32
    %36 = vector.broadcast %cst_20 : f32 to vector<64x1xf32>
    %37 = arith.mulf %35, %36 : vector<64x1xf32>
    %cst_21 = arith.constant 9.99999974E-6 : f32
    %38 = vector.broadcast %cst_21 : f32 to vector<64x1xf32>
    %39 = arith.addf %37, %38 : vector<64x1xf32>
    %40 = math.rsqrt %39 : vector<64x1xf32>
    %c0_22 = arith.constant 0 : index
    %c0_23 = arith.constant 0 : index
    %41 = vector.load %arg3[%c0_22, %c0_23] : memref<64x1xf32, #tpu.memory_space<vmem>>, vector<64x1xf32>
    %42 = arith.mulf %40, %41 : vector<64x1xf32>
    %c0_24 = arith.constant 0 : index
    %c0_25 = arith.constant 0 : index
    %43 = vector.load %arg4[%c0_24, %c0_25] : memref<64x1xf32, #tpu.memory_space<vmem>>, vector<64x1xf32>
    %44 = arith.mulf %26, %42 : vector<64x1xf32>
    %45 = arith.subf %43, %44 : vector<64x1xf32>
    %46 = vector.broadcast %42 : vector<64x1xf32> to vector<64x4xf32>
    %47 = arith.mulf %8, %46 : vector<64x4xf32>
    %48 = vector.broadcast %45 : vector<64x1xf32> to vector<64x4xf32>
    %49 = arith.addf %47, %48 : vector<64x4xf32>
    %cst_26 = arith.constant dense<0.000000e+00> : vector<64xf32>
    %50 = vector.multi_reduction <add>, %49, %cst_26 [1] : vector<64x4xf32> to vector<64xf32>
    %51 = vector.shape_cast %50 : vector<64xf32> to vector<64x1xf32>
    %cst_27 = arith.constant 4.000000e+00 : f32
    %52 = vector.broadcast %cst_27 : f32 to vector<64x1xf32>
    %53 = arith.divf %51, %52 : vector<64x1xf32>
    %54 = vector.broadcast %42 : vector<64x1xf32> to vector<64x4xf32>
    %55 = arith.mulf %18, %54 : vector<64x4xf32>
    %56 = vector.broadcast %45 : vector<64x1xf32> to vector<64x4xf32>
    %57 = arith.addf %55, %56 : vector<64x4xf32>
    %cst_28 = arith.constant dense<0.000000e+00> : vector<64xf32>
    %58 = vector.multi_reduction <add>, %57, %cst_28 [1] : vector<64x4xf32> to vector<64xf32>
    %59 = vector.shape_cast %58 : vector<64xf32> to vector<64x1xf32>
    %cst_29 = arith.constant 4.000000e+00 : f32
    %60 = vector.broadcast %cst_29 : f32 to vector<64x1xf32>
    %61 = arith.divf %59, %60 : vector<64x1xf32>
    %62 = tpu.concatenate %53, %61 in 1 : vector<64x1xf32>, vector<64x1xf32> -> vector<64x2xf32>
    %63 = tpu.transpose %62, [1, 0] : vector<64x2xf32> -> vector<2x64xf32>
    %c0_30 = arith.constant 0 : index
    %c0_31 = arith.constant 0 : index
    %64 = vector.load %arg5[%c0_30, %c0_31] : memref<64x8xf32, #tpu.memory_space<vmem>>, vector<64x8xf32>
    %cst_32 = arith.constant dense<0.000000e+00> : vector<2x8xf32>
    %65 = tpu.matmul %63, %64, %cst_32 {dimension_numbers = #tpu.dot_dimension_numbers<[1], [0], [0], [1], [0, 0, 1, 1], [], []>} : vector<2x64xf32>, vector<64x8xf32>, vector<2x8xf32> -> vector<2x8xf32>
    %c0_33 = arith.constant 0 : index
    %c0_34 = arith.constant 0 : index
    %66 = vector.load %arg6[%c0_33, %c0_34] : memref<1x8xf32, #tpu.memory_space<vmem>>, vector<1x8xf32>
    %67 = vector.broadcast %66 : vector<1x8xf32> to vector<2x8xf32>
    %68 = arith.addf %65, %67 : vector<2x8xf32>
    %c0_35 = arith.constant 0 : index
    %c0_36 = arith.constant 0 : index
    %69 = vector.load %arg8[%c0_35, %c0_36] : memref<2x8xf32, #tpu.memory_space<vmem>>, vector<2x8xf32>
    tpu.vector_store %arg8[%c0_35, %c0_36], %68 {strides = array<i32>} : memref<2x8xf32, #tpu.memory_space<vmem>>, vector<2x8xf32>,
    return
  }
}

</mosaic_0001>

<llo_original>
// kernel: forward.4
$region0: #{forward.4}
  #allocation0 [shape = 'u32[]', space=smem, size = 0x4, offset = 0x4, fixed_abs, tag = 'smem constant byte address 0x4 - core index']
  #allocation1 [shape = 'u32[72,128]{1,0:T(1,128)}', space=vmem, size = 0x9000, scoped, tag = 'internal scratch']
  %s0 = inlined_call_operand.vmem [shape: f32[2,64,256], index: 0, kind: input, shape index: {}]
  %s1 = inlined_call_operand.vmem [shape: f32[4,64], index: 1, kind: input, shape index: {}]
  %s2 = inlined_call_operand.vmem [shape: f32[4,1], index: 2, kind: input, shape index: {}]
  %s3 = inlined_call_operand.vmem [shape: f32[4,1], index: 3, kind: input, shape index: {}]
  %s4 = inlined_call_operand.vmem [shape: f32[4,1], index: 4, kind: input, shape index: {}]
  %s5 = inlined_call_operand.hbm [shape: f32[2,4,256], index: 5, kind: output, shape index: {0}]
  %s6 = inlined_call_operand.vmem [shape: f32[2,4,256], index: 6, kind: output, shape index: {1}]
  %7 = xla_tuple %s5, %s6
  %s8 = sld [smem:[#allocation0]]
  $region38: #{forward.4} parent=0
    _
  %s10 = ssub.s32 1, %s8
  %s11 = scalar_select 0, %s10, %s8
  $region1: #{forward.4} parent=0
    #allocation2 [shape = 'u8[8192]{0}', space=vmem, size = 0x2000, scoped, tag = 'output window, operand 0, single buffered']
    #allocation3 [shape = 's32[1]{0}', space=sflag, size = 0x4, scoped, tag = 'scoped memory for forward.4']
    %12 = vsyncpa [#allocation3], 0
    // Predicated region
    $region2: #{forward.4} parent=1 // pred_check
      _
    $region3: #{forward.4} parent=1 // pred_check_branch
      %14 = sbr.rel (0) target = $region5
    $region4: #{forward.4} parent=1 // pred_region
      _
    $region5: #{forward.4} parent=1 // pred_fallthru
      _
    // Predicated region
    $region6: #{forward.4} parent=1 // pred_check
      _
    $region7: #{forward.4} parent=1 // pred_check_branch
      %16 = sbr.rel (0) target = $region9
    $region8: #{forward.4} parent=1 // pred_region
      _
    $region9: #{forward.4} parent=1 // pred_fallthru
      _
    // Predicated region
    $region10: #{forward.4} parent=1 // pred_check
      _
    $region11: #{forward.4} parent=1 // pred_check_branch
      %18 = sbr.rel (0) target = $region13
    $region12: #{forward.4} parent=1 // pred_region
      _
    $region13: #{forward.4} parent=1 // pred_fallthru
      _
    // Predicated region
    $region14: #{forward.4} parent=1 // pred_check
      _
    $region15: #{forward.4} parent=1 // pred_check_branch
      %20 = sbr.rel (0) target = $region17
    $region16: #{forward.4} parent=1 // pred_region
      _
    $region17: #{forward.4} parent=1 // pred_fallthru
      _
    // Predicated region
    $region18: #{forward.4} parent=1 // pred_check
      _
    $region19: #{forward.4} parent=1 // pred_check_branch
      %22 = sbr.rel (0) target = $region21
    $region20: #{forward.4} parent=1 // pred_region
      _
    $region21: #{forward.4} parent=1 // pred_fallthru
      _
    %v23 = vld [vmem:[%s1] sm:$0xf]
    %v24 = vld [vmem:[%s2] sm:$0xf]
    %v25 = vld [vmem:[%s0] sm:$0xff]
    %v26 = vld [vmem:[%s0 + $0x8] sm:$0xff]
    %v27 = vld [vmem:[%s0 + $0x10] sm:$0xff]
    %v28 = vld [vmem:[%s0 + $0x18] sm:$0xff]
    %v29 = vld [vmem:[%s0 + $0x20] sm:$0xff]
    %v30 = vld [vmem:[%s0 + $0x28] sm:$0xff]
    %v31 = vld [vmem:[%s0 + $0x30] sm:$0xff]
    %v32 = vld [vmem:[%s0 + $0x38] sm:$0xff]
    %v33 = vld [vmem:[%s0 + $0x40] sm:$0xff]
    %v34 = vld [vmem:[%s0 + $0x48] sm:$0xff]
    %v35 = vld [vmem:[%s0 + $0x50] sm:$0xff]
    %v36 = vld [vmem:[%s0 + $0x58] sm:$0xff]
    %v37 = vld [vmem:[%s0 + $0x60] sm:$0xff]
    %v38 = vld [vmem:[%s0 + $0x68] sm:$0xff]
    %v39 = vld [vmem:[%s0 + $0x70] sm:$0xff]
    %v40 = vld [vmem:[%s0 + $0x78] sm:$0xff]
    %42 = vset.pattern.permute.xlu0 0
    %43 = vperm.xlu0 %42, %v24
    %v44 = vpop.permute.xlu0 %43
    %vm46 = vcmask 523264
    %v48 = vsel %vm46, %v23, 0
    %50 = vmatpush.msra.mxu0 0.0
    %51 = vmatpush.msra.mxu0 0.0
    %52 = vmatpush.msra.mxu0 0.0
    %53 = vmatpush.msra.mxu0 0.0
    %54 = vmatpush.msra.mxu0 0.0
    %55 = vmatpush.msra.mxu0 0.0
    %56 = vmatpush.msra.mxu0 0.0
    %57 = vmatpush.msra.mxu0 0.0
    %58 = vmatpush.msra.mxu0 %v39
    %59 = vmatpush.msra.mxu0 %v37
    %60 = vmatpush.msra.mxu0 %v35
    %61 = vmatpush.msra.mxu0 %v33
    %62 = vmatpush.msra.mxu0 %v31
    %63 = vmatpush.msra.mxu0 %v29
    %64 = vmatpush.msra.mxu0 %v27
    %65 = vmatpush.msra.mxu0 %v25
    %66 = vmatmul.f32.gmra.mxu0 %v48
    %v67 = vpop.f32.mrf.mxu0
    %v68 = vadd.f32 %v44, %v67
    %69 = vdwg.mxu0
    %70 = vmatpush.msra.mxu0 0.0
    %71 = vmatpush.msra.mxu0 0.0
    %72 = vmatpush.msra.mxu0 0.0
    %73 = vmatpush.msra.mxu0 0.0
    %74 = vmatpush.msra.mxu0 0.0
    %75 = vmatpush.msra.mxu0 0.0
    %76 = vmatpush.msra.mxu0 0.0
    %77 = vmatpush.msra.mxu0 0.0
    %78 = vmatpush.msra.mxu0 %v40
    %79 = vmatpush.msra.mxu0 %v38
    %80 = vmatpush.msra.mxu0 %v36
    %81 = vmatpush.msra.mxu0 %v34
    %82 = vmatpush.msra.mxu0 %v32
    %83 = vmatpush.msra.mxu0 %v30
    %84 = vmatpush.msra.mxu0 %v28
    %85 = vmatpush.msra.mxu0 %v26
    %86 = vmatmul.f32.gmra.mxu0 %v48
    %v87 = vpop.f32.mrf.mxu0
    %v88 = vadd.f32 %v44, %v87
    %89 = vdwg.mxu0
    %v90 = vmax.f32 %v68, 0.0
    %v91 = vmax.f32 %v88, 0.0
    %v94 = vrot.slane %v91, 4
    %vm95 = vcmask 1043456
    %v96 = vsel %vm95, %v90, %v94
    %98 = vst [vmem:[#allocation2] sm:$0xff] %v96
    %s99 = scalar_lea.vmem %s0, 128
    %v100 = vld [vmem:[%s99] sm:$0xff]
    %v101 = vld [vmem:[%s99 + $0x8] sm:$0xff]
    %v102 = vld [vmem:[%s99 + $0x10] sm:$0xff]
    %v103 = vld [vmem:[%s99 + $0x18] sm:$0xff]
    %v104 = vld [vmem:[%s99 + $0x20] sm:$0xff]
    %v105 = vld [vmem:[%s99 + $0x28] sm:$0xff]
    %v106 = vld [vmem:[%s99 + $0x30] sm:$0xff]
    %v107 = vld [vmem:[%s99 + $0x38] sm:$0xff]
    %v108 = vld [vmem:[%s99 + $0x40] sm:$0xff]
    %v109 = vld [vmem:[%s99 + $0x48] sm:$0xff]
    %v110 = vld [vmem:[%s99 + $0x50] sm:$0xff]
    %v111 = vld [vmem:[%s99 + $0x58] sm:$0xff]
    %v112 = vld [vmem:[%s99 + $0x60] sm:$0xff]
    %v113 = vld [vmem:[%s99 + $0x68] sm:$0xff]
    %v114 = vld [vmem:[%s99 + $0x70] sm:$0xff]
    %v115 = vld [vmem:[%s99 + $0x78] sm:$0xff]
    %116 = vmatpush.msra.mxu0 0.0
    %117 = vmatpush.msra.mxu0 0.0
    %118 = vmatpush.msra.mxu0 0.0
    %119 = vmatpush.msra.mxu0 0.0
    %120 = vmatpush.msra.mxu0 0.0
    %121 = vmatpush.msra.mxu0 0.0
    %122 = vmatpush.msra.mxu0 0.0
    %123 = vmatpush.msra.mxu0 0.0
    %124 = vmatpush.msra.mxu0 %v114
    %125 = vmatpush.msra.mxu0 %v112
    %126 = vmatpush.msra.mxu0 %v110
    %127 = vmatpush.msra.mxu0 %v108
    %128 = vmatpush.msra.mxu0 %v106
    %129 = vmatpush.msra.mxu0 %v104
    %130 = vmatpush.msra.mxu0 %v102
    %131 = vmatpush.msra.mxu0 %v100
    %132 = vmatmul.f32.gmra.mxu0 %v48
    %v133 = vpop.f32.mrf.mxu0
    %v134 = vadd.f32 %v44, %v133
    %135 = vdwg.mxu0
    %136 = vmatpush.msra.mxu0 0.0
    %137 = vmatpush.msra.mxu0 0.0
    %138 = vmatpush.msra.mxu0 0.0
    %139 = vmatpush.msra.mxu0 0.0
    %140 = vmatpush.msra.mxu0 0.0
    %141 = vmatpush.msra.mxu0 0.0
    %142 = vmatpush.msra.mxu0 0.0
    %143 = vmatpush.msra.mxu0 0.0
    %144 = vmatpush.msra.mxu0 %v115
    %145 = vmatpush.msra.mxu0 %v113
    %146 = vmatpush.msra.mxu0 %v111
    %147 = vmatpush.msra.mxu0 %v109
    %148 = vmatpush.msra.mxu0 %v107
    %149 = vmatpush.msra.mxu0 %v105
    %150 = vmatpush.msra.mxu0 %v103
    %151 = vmatpush.msra.mxu0 %v101
    %152 = vmatmul.f32.gmra.mxu0 %v48
    %v153 = vpop.f32.mrf.mxu0
    %v154 = vadd.f32 %v44, %v153
    %155 = vdwg.mxu0
    %v156 = vmax.f32 %v134, 0.0
    %v157 = vmax.f32 %v154, 0.0
    %v160 = vrot.slane %v157, 4
    %v161 = vsel %vm95, %v156, %v160
    %s163 = scalar_lea.vmem [#allocation2], 8
    %164 = vst [vmem:[%s163] sm:$0xff] %v161
    %v165 = vadd.f32 %v90, %v156
    %v166 = vadd.f32 %v91, %v157
    %v167 = vsel %vm95, %v165, 0.0
    %v168 = vsel %vm95, %v166, 0.0
    %v169 = vadd.f32 %v167, %v168
    %170 = vadd.xlane.f32.xlu0 %v169
    %v171 = vpop.xlane.xlu0 %170
    %v172 = vmul.f32 %v171, 0.001953125
    %v173 = vsub.f32 %v90, %v172
    %v174 = vsub.f32 %v91, %v172
    %v175 = vmul.f32 %v173, %v173
    %v176 = vmul.f32 %v174, %v174
    %v177 = vsub.f32 %v156, %v172
    %v178 = vsub.f32 %v157, %v172
    %v179 = vmul.f32 %v177, %v177
    %v180 = vmul.f32 %v178, %v178
    %v181 = vadd.f32 %v175, %v179
    %v182 = vadd.f32 %v176, %v180
    %v183 = vsel %vm95, %v181, 0.0
    %v184 = vsel %vm95, %v182, 0.0
    %v185 = vadd.f32 %v183, %v184
    %186 = vadd.xlane.f32.xlu0 %v185
    %v187 = vpop.xlane.xlu0 %186
    %v188 = vmul.f32 %v187, 0.001953125
    %v189 = vadd.f32 %v188, 1e-05
    %v190 = vrsqrt.pop %v189
    %v191 = vmul.f32 %v190, %v189
    %v192 = vmul.f32 %v191, %v190
    %v193 = vmul.f32 0.5, %v192
    %v194 = vsub.f32 1.5, %v193
    %v195 = vmul.f32 %v190, %v194
    %vm196 = vweird.f32 %v189
    %vm197 = vweird.f32 %v190
    %vm198 = vmor %vm196, %vm197
    %v199 = vsel %vm198, %v190, %v195
    %v200 = vld [vmem:[%s3] sm:$0xf]
    %v201 = vmul.f32 %v199, %v200
    %v202 = vld [vmem:[%s4] sm:$0xf]
    %v203 = vmul.f32 %v172, %v201
    %v204 = vsub.f32 %v202, %v203
    %206 = vset.pattern.permute.xlu0 0
    %207 = vperm.xlu0 %206, %v201
    %v208 = vpop.permute.xlu0 %207
    %v210 = vmul.f32 %v90, %v208
    %v211 = vmul.f32 %v91, %v208
    %213 = vset.pattern.permute.xlu0 0
    %214 = vperm.xlu0 %213, %v204
    %v215 = vpop.permute.xlu0 %214
    %v217 = vadd.f32 %v210, %v215
    %v218 = vadd.f32 %v211, %v215
    %v221 = vrot.slane %v218, 4
    %v222 = vsel %vm95, %v217, %v221
    %224 = vst [vmem:[%s6] sm:$0xff] %v222
    %v225 = vmul.f32 %v156, %v208
    %v226 = vmul.f32 %v157, %v208
    %v227 = vadd.f32 %v225, %v215
    %v228 = vadd.f32 %v226, %v215
    %v231 = vrot.slane %v228, 4
    %v232 = vsel %vm95, %v227, %v231
    %s234 = scalar_lea.vmem %s6, 8
    %235 = vst [vmem:[%s234] sm:$0xff] %v232
    // Predicated region
    $region22: #{forward.4} parent=1 // pred_check
      _
    $region23: #{forward.4} parent=1 // pred_check_branch
      %237 = sbr.rel (0) target = $region25
    $region24: #{forward.4} parent=1 // pred_region
      %239 = vsyncadd [#allocation3], 0
      %s240 = sshll.u32 [#allocation2], 4
      %s241 = int_to_ptr.vmem [resolvable:$true] %s240
      %s242 = sshll.u32 %s5, 4
      %s243 = int_to_ptr.hbm [resolvable:$true] %s242
      %248 = dma.vmem_to_hbm [thread:$0]  %s241, 256, %s243, [#allocation3], 128, 128, 8
    $region25: #{forward.4} parent=1 // pred_fallthru
      _
    // Predicated region
    $region26: #{forward.4} parent=1 // pred_check
      _
    $region27: #{forward.4} parent=1 // pred_check_branch
      %250 = sbr.rel (0) target = $region29
    $region28: #{forward.4} parent=1 // pred_region
      _
    $region29: #{forward.4} parent=1 // pred_fallthru
      _
    // Predicated region
    $region30: #{forward.4} parent=1 // pred_check
      _
    $region31: #{forward.4} parent=1 // pred_check_branch
      %252 = sbr.rel (0) target = $region33
    $region32: #{forward.4} parent=1 // pred_region
      %254 = dma.done [#allocation3], 256
    $region33: #{forward.4} parent=1 // pred_fallthru
      _
    // Predicated region
    $region34: #{forward.4} parent=1 // pred_check
      _
    $region35: #{forward.4} parent=1 // pred_check_branch
      %256 = sbr.rel (0) target = $region37
    $region36: #{forward.4} parent=1 // pred_region
      _
    $region37: #{forward.4} parent=1 // pred_fallthru
      _
    %257 = vsyncpa [#allocation3], 1

// kernel: forward.5
$region0: #{forward.5}
  #allocation0 [shape = 'u32[]', space=smem, size = 0x4, offset = 0x4, fixed_abs, tag = 'smem constant byte address 0x4 - core index']
  #allocation1 [shape = 'u32[72,128]{1,0:T(1,128)}', space=vmem, size = 0x9000, scoped, tag = 'internal scratch']
  %s0 = inlined_call_operand.vmem [shape: f32[2,36,64], index: 0, kind: input, shape index: {}]
  %s1 = inlined_call_operand.vmem [shape: f32[16,36], index: 1, kind: input, shape index: {}]
  %s2 = inlined_call_operand.vmem [shape: f32[16,1], index: 2, kind: input, shape index: {}]
  %s3 = inlined_call_operand.vmem [shape: f32[16,1], index: 3, kind: input, shape index: {}]
  %s4 = inlined_call_operand.vmem [shape: f32[16,1], index: 4, kind: input, shape index: {}]
  %s5 = inlined_call_operand.hbm [shape: f32[2,16,64], index: 5, kind: output, shape index: {0}]
  %s6 = inlined_call_operand.vmem [shape: f32[2,16,64], index: 6, kind: output, shape index: {1}]
  %7 = xla_tuple %s5, %s6
  %s8 = sld [smem:[#allocation0]]
  $region38: #{forward.5} parent=0
    _
  %s10 = ssub.s32 1, %s8
  %s11 = scalar_select 0, %s10, %s8
  $region1: #{forward.5} parent=0
    #allocation2 [shape = 'u8[16384]{0}', space=vmem, size = 0x4000, scoped, tag = 'output window, operand 0, single buffered']
    #allocation3 [shape = 's32[1]{0}', space=sflag, size = 0x4, scoped, tag = 'scoped memory for forward.5']
    %12 = vsyncpa [#allocation3], 0
    // Predicated region
    $region2: #{forward.5} parent=1 // pred_check
      _
    $region3: #{forward.5} parent=1 // pred_check_branch
      %14 = sbr.rel (0) target = $region5
    $region4: #{forward.5} parent=1 // pred_region
      _
    $region5: #{forward.5} parent=1 // pred_fallthru
      _
    // Predicated region
    $region6: #{forward.5} parent=1 // pred_check
      _
    $region7: #{forward.5} parent=1 // pred_check_branch
      %16 = sbr.rel (0) target = $region9
    $region8: #{forward.5} parent=1 // pred_region
      _
    $region9: #{forward.5} parent=1 // pred_fallthru
      _
    // Predicated region
    $region10: #{forward.5} parent=1 // pred_check
      _
    $region11: #{forward.5} parent=1 // pred_check_branch
      %18 = sbr.rel (0) target = $region13
    $region12: #{forward.5} parent=1 // pred_region
      _
    $region13: #{forward.5} parent=1 // pred_fallthru
      _
    // Predicated region
    $region14: #{forward.5} parent=1 // pred_check
      _
    $region15: #{forward.5} parent=1 // pred_check_branch
      %20 = sbr.rel (0) target = $region17
    $region16: #{forward.5} parent=1 // pred_region
      _
    $region17: #{forward.5} parent=1 // pred_fallthru
      _
    // Predicated region
    $region18: #{forward.5} parent=1 // pred_check
      _
    $region19: #{forward.5} parent=1 // pred_check_branch
      %22 = sbr.rel (0) target = $region21
    $region20: #{forward.5} parent=1 // pred_region
      _
    $region21: #{forward.5} parent=1 // pred_fallthru
      _
    %v23 = vld [vmem:[%s1] sm:$0xff]
    %v24 = vld [vmem:[%s1 + $0x8] sm:$0xff]
    %v25 = vld [vmem:[%s2] sm:$0xff]
    %v26 = vld [vmem:[%s2 + $0x8] sm:$0xff]
    %v27 = vld [vmem:[%s0] sm:$0xff]
    %v28 = vld [vmem:[%s0 + $0x8] sm:$0xff]
    %v29 = vld [vmem:[%s0 + $0x10] sm:$0xff]
    %v30 = vld [vmem:[%s0 + $0x18] sm:$0xff]
    %v31 = vld [vmem:[%s0 + $0x20] sm:$0xf]
    %33 = vset.pattern.permute.xlu0 0
    %34 = vperm.xlu0 %33, %v25
    %v35 = vpop.permute.xlu0 %34
    %38 = vset.pattern.permute.xlu0 0
    %39 = vperm.xlu0 %38, %v26
    %v40 = vpop.permute.xlu0 %39
    %vm42 = vcmask 293888
    %v44 = vsel %vm42, %v23, 0
    %v47 = vsel %vm42, %v24, 0
    %vm49 = vcmask 1043456
    %v51 = vsel %vm49, %v31, 0
    %53 = vmatpush.msra.mxu0 0.0
    %54 = vmatpush.msra.mxu0 0.0
    %55 = vmatpush.msra.mxu0 0.0
    %56 = vmatpush.msra.mxu0 0.0
    %57 = vmatpush.msra.mxu0 0.0
    %58 = vmatpush.msra.mxu0 0.0
    %59 = vmatpush.msra.mxu0 0.0
    %60 = vmatpush.msra.mxu0 0.0
    %61 = vmatpush.msra.mxu0 0.0
    %62 = vmatpush.msra.mxu0 0.0
    %63 = vmatpush.msra.mxu0 0.0
    %64 = vmatpush.msra.mxu0 %v51
    %65 = vmatpush.msra.mxu0 %v30
    %66 = vmatpush.msra.mxu0 %v29
    %67 = vmatpush.msra.mxu0 %v28
    %68 = vmatpush.msra.mxu0 %v27
    %69 = vmatmul.f32.gmra.mxu0 %v44
    %v70 = vpop.f32.mrf.mxu0
    %v71 = vadd.f32 %v35, %v70
    %72 = vmatmul.f32.gmra.mxu0 %v47
    %v73 = vpop.f32.mrf.mxu0
    %v74 = vadd.f32 %v40, %v73
    %75 = vdwg.mxu0
    %v76 = vmax.f32 %v71, 0.0
    %v77 = vmax.f32 %v74, 0.0
    %vm78 = vcmask 523264
    %79 = vst.msk [vmem:[#allocation2] sm:$0xff] %vm78, %v76
    %80 = vst.msk [vmem:[#allocation2 + $0x8] sm:$0xff] %vm78, %v77
    %s81 = scalar_lea.vmem %s0, 40
    %v82 = vld [vmem:[%s81] sm:$0xff]
    %v83 = vld [vmem:[%s81 + $0x8] sm:$0xff]
    %v84 = vld [vmem:[%s81 + $0x10] sm:$0xff]
    %v85 = vld [vmem:[%s81 + $0x18] sm:$0xff]
    %v86 = vld [vmem:[%s81 + $0x20] sm:$0xf]
    %v88 = vsel %vm49, %v86, 0
    %90 = vmatpush.msra.mxu0 0.0
    %91 = vmatpush.msra.mxu0 0.0
    %92 = vmatpush.msra.mxu0 0.0
    %93 = vmatpush.msra.mxu0 0.0
    %94 = vmatpush.msra.mxu0 0.0
    %95 = vmatpush.msra.mxu0 0.0
    %96 = vmatpush.msra.mxu0 0.0
    %97 = vmatpush.msra.mxu0 0.0
    %98 = vmatpush.msra.mxu0 0.0
    %99 = vmatpush.msra.mxu0 0.0
    %100 = vmatpush.msra.mxu0 0.0
    %101 = vmatpush.msra.mxu0 %v88
    %102 = vmatpush.msra.mxu0 %v85
    %103 = vmatpush.msra.mxu0 %v84
    %104 = vmatpush.msra.mxu0 %v83
    %105 = vmatpush.msra.mxu0 %v82
    %106 = vmatmul.f32.gmra.mxu0 %v44
    %v107 = vpop.f32.mrf.mxu0
    %v108 = vadd.f32 %v35, %v107
    %109 = vmatmul.f32.gmra.mxu0 %v47
    %v110 = vpop.f32.mrf.mxu0
    %v111 = vadd.f32 %v40, %v110
    %112 = vdwg.mxu0
    %v113 = vmax.f32 %v108, 0.0
    %v114 = vmax.f32 %v111, 0.0
    %s115 = scalar_lea.vmem [#allocation2], 16
    %116 = vst.msk [vmem:[%s115] sm:$0xff] %vm78, %v113
    %117 = vst.msk [vmem:[%s115 + $0x8] sm:$0xff] %vm78, %v114
    %v118 = vadd.f32 %v76, %v113
    %v119 = vadd.f32 %v77, %v114
    %v120 = vsel %vm78, %v118, 0.0
    %121 = vadd.xlane.f32.xlu0 %v120
    %v122 = vpop.xlane.xlu0 %121
    %v123 = vsel %vm78, %v119, 0.0
    %124 = vadd.xlane.f32.xlu0 %v123
    %v125 = vpop.xlane.xlu0 %124
    %v126 = vmul.f32 %v122, 0.0078125
    %v127 = vmul.f32 %v125, 0.0078125
    %v128 = vsub.f32 %v76, %v126
    %v129 = vsub.f32 %v77, %v127
    %v130 = vmul.f32 %v128, %v128
    %v131 = vmul.f32 %v129, %v129
    %v132 = vsub.f32 %v113, %v126
    %v133 = vsub.f32 %v114, %v127
    %v134 = vmul.f32 %v132, %v132
    %v135 = vmul.f32 %v133, %v133
    %v136 = vadd.f32 %v130, %v134
    %v137 = vadd.f32 %v131, %v135
    %v138 = vsel %vm78, %v136, 0.0
    %139 = vadd.xlane.f32.xlu0 %v138
    %v140 = vpop.xlane.xlu0 %139
    %v141 = vsel %vm78, %v137, 0.0
    %142 = vadd.xlane.f32.xlu0 %v141
    %v143 = vpop.xlane.xlu0 %142
    %v144 = vmul.f32 %v140, 0.0078125
    %v145 = vmul.f32 %v143, 0.0078125
    %v146 = vadd.f32 %v144, 1e-05
    %v147 = vadd.f32 %v145, 1e-05
    %v148 = vrsqrt.pop %v146
    %v149 = vmul.f32 %v148, %v146
    %v150 = vmul.f32 %v149, %v148
    %v151 = vmul.f32 0.5, %v150
    %v152 = vsub.f32 1.5, %v151
    %v153 = vmul.f32 %v148, %v152
    %vm154 = vweird.f32 %v146
    %vm155 = vweird.f32 %v148
    %vm156 = vmor %vm154, %vm155
    %v157 = vsel %vm156, %v148, %v153
    %v158 = vrsqrt.pop %v147
    %v159 = vmul.f32 %v158, %v147
    %v160 = vmul.f32 %v159, %v158
    %v161 = vmul.f32 0.5, %v160
    %v162 = vsub.f32 1.5, %v161
    %v163 = vmul.f32 %v158, %v162
    %vm164 = vweird.f32 %v147
    %vm165 = vweird.f32 %v158
    %vm166 = vmor %vm164, %vm165
    %v167 = vsel %vm166, %v158, %v163
    %v168 = vld [vmem:[%s3] sm:$0xff]
    %v169 = vld [vmem:[%s3 + $0x8] sm:$0xff]
    %v170 = vmul.f32 %v157, %v168
    %v171 = vmul.f32 %v167, %v169
    %v172 = vld [vmem:[%s4] sm:$0xff]
    %v173 = vld [vmem:[%s4 + $0x8] sm:$0xff]
    %v174 = vmul.f32 %v126, %v170
    %v175 = vmul.f32 %v127, %v171
    %v176 = vsub.f32 %v172, %v174
    %v177 = vsub.f32 %v173, %v175
    %179 = vset.pattern.permute.xlu0 0
    %180 = vperm.xlu0 %179, %v170
    %v181 = vpop.permute.xlu0 %180
    %184 = vset.pattern.permute.xlu0 0
    %185 = vperm.xlu0 %184, %v171
    %v186 = vpop.permute.xlu0 %185
    %v188 = vmul.f32 %v76, %v181
    %v189 = vmul.f32 %v77, %v186
    %191 = vset.pattern.permute.xlu0 0
    %192 = vperm.xlu0 %191, %v176
    %v193 = vpop.permute.xlu0 %192
    %196 = vset.pattern.permute.xlu0 0
    %197 = vperm.xlu0 %196, %v177
    %v198 = vpop.permute.xlu0 %197
    %v200 = vadd.f32 %v188, %v193
    %v201 = vadd.f32 %v189, %v198
    %202 = vst.msk [vmem:[%s6] sm:$0xff] %vm78, %v200
    %203 = vst.msk [vmem:[%s6 + $0x8] sm:$0xff] %vm78, %v201
    %v204 = vmul.f32 %v113, %v181
    %v205 = vmul.f32 %v114, %v186
    %v206 = vadd.f32 %v204, %v193
    %v207 = vadd.f32 %v205, %v198
    %s208 = scalar_lea.vmem %s6, 16
    %209 = vst.msk [vmem:[%s208] sm:$0xff] %vm78, %v206
    %210 = vst.msk [vmem:[%s208 + $0x8] sm:$0xff] %vm78, %v207
    // Predicated region
    $region22: #{forward.5} parent=1 // pred_check
      _
    $region23: #{forward.5} parent=1 // pred_check_branch
      %212 = sbr.rel (0) target = $region25
    $region24: #{forward.5} parent=1 // pred_region
      %214 = vsyncadd [#allocation3], 0
      %s215 = sshll.u32 [#allocation2], 4
      %s216 = int_to_ptr.vmem [resolvable:$true] %s215
      %s217 = sshll.u32 %s5, 4
      %s218 = int_to_ptr.hbm [resolvable:$true] %s217
      %223 = dma.vmem_to_hbm [thread:$0]  %s216, 512, %s218, [#allocation3], 128, 128, 8
    $region25: #{forward.5} parent=1 // pred_fallthru
      _
    // Predicated region
    $region26: #{forward.5} parent=1 // pred_check
      _
    $region27: #{forward.5} parent=1 // pred_check_branch
      %225 = sbr.rel (0) target = $region29
    $region28: #{forward.5} parent=1 // pred_region
      _
    $region29: #{forward.5} parent=1 // pred_fallthru
      _
    // Predicated region
    $region30: #{forward.5} parent=1 // pred_check
      _
    $region31: #{forward.5} parent=1 // pred_check_branch
      %227 = sbr.rel (0) target = $region33
    $region32: #{forward.5} parent=1 // pred_region
      %229 = dma.done [#allocation3], 512
    $region33: #{forward.5} parent=1 // pred_fallthru
      _
    // Predicated region
    $region34: #{forward.5} parent=1 // pred_check
      _
    $region35: #{forward.5} parent=1 // pred_check_branch
      %231 = sbr.rel (0) target = $region37
    $region36: #{forward.5} parent=1 // pred_region
      _
    $region37: #{forward.5} parent=1 // pred_fallthru
      _
    %232 = vsyncpa [#allocation3], 1

// kernel: forward.6
$region0: #{forward.6}
  #allocation0 [shape = 'u32[]', space=smem, size = 0x4, offset = 0x4, fixed_abs, tag = 'smem constant byte address 0x4 - core index']
  #allocation1 [shape = 'u32[72,128]{1,0:T(1,128)}', space=vmem, size = 0x9000, scoped, tag = 'internal scratch']
  %s0 = inlined_call_operand.vmem [shape: f32[2,144,16], index: 0, kind: input, shape index: {}]
  %s1 = inlined_call_operand.vmem [shape: f32[32,144], index: 1, kind: input, shape index: {}]
  %s2 = inlined_call_operand.vmem [shape: f32[32,1], index: 2, kind: input, shape index: {}]
  %s3 = inlined_call_operand.vmem [shape: f32[32,1], index: 3, kind: input, shape index: {}]
  %s4 = inlined_call_operand.vmem [shape: f32[32,1], index: 4, kind: input, shape index: {}]
  %s5 = inlined_call_operand.vmem [shape: f32[2,32,16], index: 5, kind: output, shape index: {0}]
  %s6 = inlined_call_operand.vmem [shape: f32[2,32,16], index: 6, kind: output, shape index: {1}]
  %7 = xla_tuple %s5, %s6
  %s8 = sld [smem:[#allocation0]]
  $region38: #{forward.6} parent=0
    _
  %s10 = ssub.s32 1, %s8
  %s11 = scalar_select 0, %s10, %s8
  // Predicated region
  $region2: #{forward.6} parent=0 // pred_check
    _
  $region3: #{forward.6} parent=0 // pred_check_branch
    %13 = sbr.rel (0) target = $region5
  $region4: #{forward.6} parent=0 // pred_region
    _
  $region5: #{forward.6} parent=0 // pred_fallthru
    _
  // Predicated region
  $region6: #{forward.6} parent=0 // pred_check
    _
  $region7: #{forward.6} parent=0 // pred_check_branch
    %15 = sbr.rel (0) target = $region9
  $region8: #{forward.6} parent=0 // pred_region
    _
  $region9: #{forward.6} parent=0 // pred_fallthru
    _
  // Predicated region
  $region10: #{forward.6} parent=0 // pred_check
    _
  $region11: #{forward.6} parent=0 // pred_check_branch
    %17 = sbr.rel (0) target = $region13
  $region12: #{forward.6} parent=0 // pred_region
    _
  $region13: #{forward.6} parent=0 // pred_fallthru
    _
  // Predicated region
  $region14: #{forward.6} parent=0 // pred_check
    _
  $region15: #{forward.6} parent=0 // pred_check_branch
    %19 = sbr.rel (0) target = $region17
  $region16: #{forward.6} parent=0 // pred_region
    _
  $region17: #{forward.6} parent=0 // pred_fallthru
    _
  // Predicated region
  $region18: #{forward.6} parent=0 // pred_check
    _
  $region19: #{forward.6} parent=0 // pred_check_branch
    %21 = sbr.rel (0) target = $region21
  $region20: #{forward.6} parent=0 // pred_region
    _
  $region21: #{forward.6} parent=0 // pred_fallthru
    _
  %v22 = vld [vmem:[%s1] sm:$0xff]
  %v23 = vld [vmem:[%s1 + $0x8] sm:$0xff]
  %v24 = vld [vmem:[%s1 + $0x10] sm:$0xff]
  %v25 = vld [vmem:[%s1 + $0x18] sm:$0xff]
  %v26 = vld [vmem:[%s1 + $0x20] sm:$0xff]
  %v27 = vld [vmem:[%s1 + $0x28] sm:$0xff]
  %v28 = vld [vmem:[%s1 + $0x30] sm:$0xff]
  %v29 = vld [vmem:[%s1 + $0x38] sm:$0xff]
  %v30 = vld [vmem:[%s2] sm:$0xff]
  %v31 = vld [vmem:[%s2 + $0x8] sm:$0xff]
  %v32 = vld [vmem:[%s2 + $0x10] sm:$0xff]
  %v33 = vld [vmem:[%s2 + $0x18] sm:$0xff]
  %v34 = vld [vmem:[%s0] sm:$0xff]
  %v35 = vld [vmem:[%s0 + $0x8] sm:$0xff]
  %v36 = vld [vmem:[%s0 + $0x10] sm:$0xff]
  %v37 = vld [vmem:[%s0 + $0x18] sm:$0xff]
  %v38 = vld [vmem:[%s0 + $0x20] sm:$0xff]
  %v39 = vld [vmem:[%s0 + $0x28] sm:$0xff]
  %v40 = vld [vmem:[%s0 + $0x30] sm:$0xff]
  %v41 = vld [vmem:[%s0 + $0x38] sm:$0xff]
  %v42 = vld [vmem:[%s0 + $0x40] sm:$0xff]
  %v43 = vld [vmem:[%s0 + $0x48] sm:$0xff]
  %v44 = vld [vmem:[%s0 + $0x50] sm:$0xff]
  %v45 = vld [vmem:[%s0 + $0x58] sm:$0xff]
  %v46 = vld [vmem:[%s0 + $0x60] sm:$0xff]
  %v47 = vld [vmem:[%s0 + $0x68] sm:$0xff]
  %v48 = vld [vmem:[%s0 + $0x70] sm:$0xff]
  %v49 = vld [vmem:[%s0 + $0x78] sm:$0xff]
  %v50 = vld [vmem:[%s0 + $0x80] sm:$0xff]
  %v51 = vld [vmem:[%s0 + $0x88] sm:$0xff]
  %53 = vset.pattern.permute.xlu0 0
  %54 = vperm.xlu0 %53, %v30
  %v55 = vpop.permute.xlu0 %54
  %58 = vset.pattern.permute.xlu0 0
  %59 = vperm.xlu0 %58, %v31
  %v60 = vpop.permute.xlu0 %59
  %63 = vset.pattern.permute.xlu0 0
  %64 = vperm.xlu0 %63, %v32
  %v65 = vpop.permute.xlu0 %64
  %68 = vset.pattern.permute.xlu0 0
  %69 = vperm.xlu0 %68, %v33
  %v70 = vpop.permute.xlu0 %69
  %vm72 = vcmask 130048
  %v74 = vsel %vm72, %v23, 0
  %v77 = vsel %vm72, %v25, 0
  %v80 = vsel %vm72, %v27, 0
  %v83 = vsel %vm72, %v29, 0
  %85 = vmatpush.msra.mxu0 %v49
  %86 = vmatpush.msra.mxu0 %v48
  %87 = vmatpush.msra.mxu0 %v47
  %88 = vmatpush.msra.mxu0 %v46
  %89 = vmatpush.msra.mxu0 %v45
  %90 = vmatpush.msra.mxu0 %v44
  %91 = vmatpush.msra.mxu0 %v43
  %92 = vmatpush.msra.mxu0 %v42
  %93 = vmatpush.msra.mxu0 %v41
  %94 = vmatpush.msra.mxu0 %v40
  %95 = vmatpush.msra.mxu0 %v39
  %96 = vmatpush.msra.mxu0 %v38
  %97 = vmatpush.msra.mxu0 %v37
  %98 = vmatpush.msra.mxu0 %v36
  %99 = vmatpush.msra.mxu0 %v35
  %100 = vmatpush.msra.mxu0 %v34
  %101 = vmatmul.f32.gmra.mxu0 %v22
  %v102 = vpop.f32.mrf.mxu0
  %v103 = vadd.f32 %v55, %v102
  %104 = vmatmul.f32.gmra.mxu0 %v24
  %v105 = vpop.f32.mrf.mxu0
  %v106 = vadd.f32 %v60, %v105
  %107 = vmatmul.f32.gmra.mxu0 %v26
  %v108 = vpop.f32.mrf.mxu0
  %v109 = vadd.f32 %v65, %v108
  %110 = vmatmul.f32.gmra.mxu0 %v28
  %v111 = vpop.f32.mrf.mxu0
  %v112 = vadd.f32 %v70, %v111
  %113 = vdwg.mxu0
  %114 = vmatpush.msra.mxu0 0.0
  %115 = vmatpush.msra.mxu0 0.0
  %116 = vmatpush.msra.mxu0 0.0
  %117 = vmatpush.msra.mxu0 0.0
  %118 = vmatpush.msra.mxu0 0.0
  %119 = vmatpush.msra.mxu0 0.0
  %120 = vmatpush.msra.mxu0 0.0
  %121 = vmatpush.msra.mxu0 0.0
  %122 = vmatpush.msra.mxu0 0.0
  %123 = vmatpush.msra.mxu0 0.0
  %124 = vmatpush.msra.mxu0 0.0
  %125 = vmatpush.msra.mxu0 0.0
  %126 = vmatpush.msra.mxu0 0.0
  %127 = vmatpush.msra.mxu0 0.0
  %128 = vmatpush.msra.mxu0 %v51
  %129 = vmatpush.msra.mxu0 %v50
  %130 = vmatmul.f32.gmra.mxu0 %v74
  %v131 = vpop.f32.mrf.mxu0
  %v132 = vadd.f32 %v103, %v131
  %133 = vmatmul.f32.gmra.mxu0 %v77
  %v134 = vpop.f32.mrf.mxu0
  %v135 = vadd.f32 %v106, %v134
  %136 = vmatmul.f32.gmra.mxu0 %v80
  %v137 = vpop.f32.mrf.mxu0
  %v138 = vadd.f32 %v109, %v137
  %139 = vmatmul.f32.gmra.mxu0 %v83
  %v140 = vpop.f32.mrf.mxu0
  %v141 = vadd.f32 %v112, %v140
  %142 = vdwg.mxu0
  %v143 = vmax.f32 %v132, 0.0
  %v144 = vmax.f32 %v135, 0.0
  %v145 = vmax.f32 %v138, 0.0
  %v146 = vmax.f32 %v141, 0.0
  %147 = vst.msk [vmem:[%s5] sm:$0xff] %vm72, %v143
  %148 = vst.msk [vmem:[%s5 + $0x8] sm:$0xff] %vm72, %v144
  %149 = vst.msk [vmem:[%s5 + $0x10] sm:$0xff] %vm72, %v145
  %150 = vst.msk [vmem:[%s5 + $0x18] sm:$0xff] %vm72, %v146
  %s151 = scalar_lea.vmem %s0, 144
  %v152 = vld [vmem:[%s151] sm:$0xff]
  %v153 = vld [vmem:[%s151 + $0x8] sm:$0xff]
  %v154 = vld [vmem:[%s151 + $0x10] sm:$0xff]
  %v155 = vld [vmem:[%s151 + $0x18] sm:$0xff]
  %v156 = vld [vmem:[%s151 + $0x20] sm:$0xff]
  %v157 = vld [vmem:[%s151 + $0x28] sm:$0xff]
  %v158 = vld [vmem:[%s151 + $0x30] sm:$0xff]
  %v159 = vld [vmem:[%s151 + $0x38] sm:$0xff]
  %v160 = vld [vmem:[%s151 + $0x40] sm:$0xff]
  %v161 = vld [vmem:[%s151 + $0x48] sm:$0xff]
  %v162 = vld [vmem:[%s151 + $0x50] sm:$0xff]
  %v163 = vld [vmem:[%s151 + $0x58] sm:$0xff]
  %v164 = vld [vmem:[%s151 + $0x60] sm:$0xff]
  %v165 = vld [vmem:[%s151 + $0x68] sm:$0xff]
  %v166 = vld [vmem:[%s151 + $0x70] sm:$0xff]
  %v167 = vld [vmem:[%s151 + $0x78] sm:$0xff]
  %v168 = vld [vmem:[%s151 + $0x80] sm:$0xff]
  %v169 = vld [vmem:[%s151 + $0x88] sm:$0xff]
  %170 = vmatpush.msra.mxu0 %v167
  %171 = vmatpush.msra.mxu0 %v166
  %172 = vmatpush.msra.mxu0 %v165
  %173 = vmatpush.msra.mxu0 %v164
  %174 = vmatpush.msra.mxu0 %v163
  %175 = vmatpush.msra.mxu0 %v162
  %176 = vmatpush.msra.mxu0 %v161
  %177 = vmatpush.msra.mxu0 %v160
  %178 = vmatpush.msra.mxu0 %v159
  %179 = vmatpush.msra.mxu0 %v158
  %180 = vmatpush.msra.mxu0 %v157
  %181 = vmatpush.msra.mxu0 %v156
  %182 = vmatpush.msra.mxu0 %v155
  %183 = vmatpush.msra.mxu0 %v154
  %184 = vmatpush.msra.mxu0 %v153
  %185 = vmatpush.msra.mxu0 %v152
  %186 = vmatmul.f32.gmra.mxu0 %v22
  %v187 = vpop.f32.mrf.mxu0
  %v188 = vadd.f32 %v55, %v187
  %189 = vmatmul.f32.gmra.mxu0 %v24
  %v190 = vpop.f32.mrf.mxu0
  %v191 = vadd.f32 %v60, %v190
  %192 = vmatmul.f32.gmra.mxu0 %v26
  %v193 = vpop.f32.mrf.mxu0
  %v194 = vadd.f32 %v65, %v193
  %195 = vmatmul.f32.gmra.mxu0 %v28
  %v196 = vpop.f32.mrf.mxu0
  %v197 = vadd.f32 %v70, %v196
  %198 = vdwg.mxu0
  %199 = vmatpush.msra.mxu0 0.0
  %200 = vmatpush.msra.mxu0 0.0
  %201 = vmatpush.msra.mxu0 0.0
  %202 = vmatpush.msra.mxu0 0.0
  %203 = vmatpush.msra.mxu0 0.0
  %204 = vmatpush.msra.mxu0 0.0
  %205 = vmatpush.msra.mxu0 0.0
  %206 = vmatpush.msra.mxu0 0.0
  %207 = vmatpush.msra.mxu0 0.0
  %208 = vmatpush.msra.mxu0 0.0
  %209 = vmatpush.msra.mxu0 0.0
  %210 = vmatpush.msra.mxu0 0.0
  %211 = vmatpush.msra.mxu0 0.0
  %212 = vmatpush.msra.mxu0 0.0
  %213 = vmatpush.msra.mxu0 %v169
  %214 = vmatpush.msra.mxu0 %v168
  %215 = vmatmul.f32.gmra.mxu0 %v74
  %v216 = vpop.f32.mrf.mxu0
  %v217 = vadd.f32 %v188, %v216
  %218 = vmatmul.f32.gmra.mxu0 %v77
  %v219 = vpop.f32.mrf.mxu0
  %v220 = vadd.f32 %v191, %v219
  %221 = vmatmul.f32.gmra.mxu0 %v80
  %v222 = vpop.f32.mrf.mxu0
  %v223 = vadd.f32 %v194, %v222
  %224 = vmatmul.f32.gmra.mxu0 %v83
  %v225 = vpop.f32.mrf.mxu0
  %v226 = vadd.f32 %v197, %v225
  %227 = vdwg.mxu0
  %v228 = vmax.f32 %v217, 0.0
  %v229 = vmax.f32 %v220, 0.0
  %v230 = vmax.f32 %v223, 0.0
  %v231 = vmax.f32 %v226, 0.0
  %s232 = scalar_lea.vmem %s5, 32
  %233 = vst.msk [vmem:[%s232] sm:$0xff] %vm72, %v228
  %234 = vst.msk [vmem:[%s232 + $0x8] sm:$0xff] %vm72, %v229
  %235 = vst.msk [vmem:[%s232 + $0x10] sm:$0xff] %vm72, %v230
  %236 = vst.msk [vmem:[%s232 + $0x18] sm:$0xff] %vm72, %v231
  %v237 = vadd.f32 %v143, %v228
  %v238 = vadd.f32 %v144, %v229
  %v239 = vadd.f32 %v145, %v230
  %v240 = vadd.f32 %v146, %v231
  %v241 = vsel %vm72, %v237, 0.0
  %242 = vadd.xlane.f32.xlu0 %v241
  %v243 = vpop.xlane.xlu0 %242
  %v244 = vsel %vm72, %v238, 0.0
  %245 = vadd.xlane.f32.xlu0 %v244
  %v246 = vpop.xlane.xlu0 %245
  %v247 = vsel %vm72, %v239, 0.0
  %248 = vadd.xlane.f32.xlu0 %v247
  %v249 = vpop.xlane.xlu0 %248
  %v250 = vsel %vm72, %v240, 0.0
  %251 = vadd.xlane.f32.xlu0 %v250
  %v252 = vpop.xlane.xlu0 %251
  %v253 = vmul.f32 %v243, 0.03125
  %v254 = vmul.f32 %v246, 0.03125
  %v255 = vmul.f32 %v249, 0.03125
  %v256 = vmul.f32 %v252, 0.03125
  %v257 = vsub.f32 %v143, %v253
  %v258 = vsub.f32 %v144, %v254
  %v259 = vsub.f32 %v145, %v255
  %v260 = vsub.f32 %v146, %v256
  %v261 = vmul.f32 %v257, %v257
  %v262 = vmul.f32 %v258, %v258
  %v263 = vmul.f32 %v259, %v259
  %v264 = vmul.f32 %v260, %v260
  %v265 = vsub.f32 %v228, %v253
  %v266 = vsub.f32 %v229, %v254
  %v267 = vsub.f32 %v230, %v255
  %v268 = vsub.f32 %v231, %v256
  %v269 = vmul.f32 %v265, %v265
  %v270 = vmul.f32 %v266, %v266
  %v271 = vmul.f32 %v267, %v267
  %v272 = vmul.f32 %v268, %v268
  %v273 = vadd.f32 %v261, %v269
  %v274 = vadd.f32 %v262, %v270
  %v275 = vadd.f32 %v263, %v271
  %v276 = vadd.f32 %v264, %v272
  %v277 = vsel %vm72, %v273, 0.0
  %278 = vadd.xlane.f32.xlu0 %v277
  %v279 = vpop.xlane.xlu0 %278
  %v280 = vsel %vm72, %v274, 0.0
  %281 = vadd.xlane.f32.xlu0 %v280
  %v282 = vpop.xlane.xlu0 %281
  %v283 = vsel %vm72, %v275, 0.0
  %284 = vadd.xlane.f32.xlu0 %v283
  %v285 = vpop.xlane.xlu0 %284
  %v286 = vsel %vm72, %v276, 0.0
  %287 = vadd.xlane.f32.xlu0 %v286
  %v288 = vpop.xlane.xlu0 %287
  %v289 = vmul.f32 %v279, 0.03125
  %v290 = vmul.f32 %v282, 0.03125
  %v291 = vmul.f32 %v285, 0.03125
  %v292 = vmul.f32 %v288, 0.03125
  %v293 = vadd.f32 %v289, 1e-05
  %v294 = vadd.f32 %v290, 1e-05
  %v295 = vadd.f32 %v291, 1e-05
  %v296 = vadd.f32 %v292, 1e-05
  %v297 = vrsqrt.pop %v293
  %v298 = vmul.f32 %v297, %v293
  %v299 = vmul.f32 %v298, %v297
  %v300 = vmul.f32 0.5, %v299
  %v301 = vsub.f32 1.5, %v300
  %v302 = vmul.f32 %v297, %v301
  %vm303 = vweird.f32 %v293
  %vm304 = vweird.f32 %v297
  %vm305 = vmor %vm303, %vm304
  %v306 = vsel %vm305, %v297, %v302
  %v307 = vrsqrt.pop %v294
  %v308 = vmul.f32 %v307, %v294
  %v309 = vmul.f32 %v308, %v307
  %v310 = vmul.f32 0.5, %v309
  %v311 = vsub.f32 1.5, %v310
  %v312 = vmul.f32 %v307, %v311
  %vm313 = vweird.f32 %v294
  %vm314 = vweird.f32 %v307
  %vm315 = vmor %vm313, %vm314
  %v316 = vsel %vm315, %v307, %v312
  %v317 = vrsqrt.pop %v295
  %v318 = vmul.f32 %v317, %v295
  %v319 = vmul.f32 %v318, %v317
  %v320 = vmul.f32 0.5, %v319
  %v321 = vsub.f32 1.5, %v320
  %v322 = vmul.f32 %v317, %v321
  %vm323 = vweird.f32 %v295
  %vm324 = vweird.f32 %v317
  %vm325 = vmor %vm323, %vm324
  %v326 = vsel %vm325, %v317, %v322
  %v327 = vrsqrt.pop %v296
  %v328 = vmul.f32 %v327, %v296
  %v329 = vmul.f32 %v328, %v327
  %v330 = vmul.f32 0.5, %v329
  %v331 = vsub.f32 1.5, %v330
  %v332 = vmul.f32 %v327, %v331
  %vm333 = vweird.f32 %v296
  %vm334 = vweird.f32 %v327
  %vm335 = vmor %vm333, %vm334
  %v336 = vsel %vm335, %v327, %v332
  %v337 = vld [vmem:[%s3] sm:$0xff]
  %v338 = vld [vmem:[%s3 + $0x8] sm:$0xff]
  %v339 = vld [vmem:[%s3 + $0x10] sm:$0xff]
  %v340 = vld [vmem:[%s3 + $0x18] sm:$0xff]
  %v341 = vmul.f32 %v306, %v337
  %v342 = vmul.f32 %v316, %v338
  %v343 = vmul.f32 %v326, %v339
  %v344 = vmul.f32 %v336, %v340
  %v345 = vld [vmem:[%s4] sm:$0xff]
  %v346 = vld [vmem:[%s4 + $0x8] sm:$0xff]
  %v347 = vld [vmem:[%s4 + $0x10] sm:$0xff]
  %v348 = vld [vmem:[%s4 + $0x18] sm:$0xff]
  %v349 = vmul.f32 %v253, %v341
  %v350 = vmul.f32 %v254, %v342
  %v351 = vmul.f32 %v255, %v343
  %v352 = vmul.f32 %v256, %v344
  %v353 = vsub.f32 %v345, %v349
  %v354 = vsub.f32 %v346, %v350
  %v355 = vsub.f32 %v347, %v351
  %v356 = vsub.f32 %v348, %v352
  %358 = vset.pattern.permute.xlu0 0
  %359 = vperm.xlu0 %358, %v341
  %v360 = vpop.permute.xlu0 %359
  %363 = vset.pattern.permute.xlu0 0
  %364 = vperm.xlu0 %363, %v342
  %v365 = vpop.permute.xlu0 %364
  %368 = vset.pattern.permute.xlu0 0
  %369 = vperm.xlu0 %368, %v343
  %v370 = vpop.permute.xlu0 %369
  %373 = vset.pattern.permute.xlu0 0
  %374 = vperm.xlu0 %373, %v344
  %v375 = vpop.permute.xlu0 %374
  %v377 = vmul.f32 %v143, %v360
  %v378 = vmul.f32 %v144, %v365
  %v379 = vmul.f32 %v145, %v370
  %v380 = vmul.f32 %v146, %v375
  %382 = vset.pattern.permute.xlu0 0
  %383 = vperm.xlu0 %382, %v353
  %v384 = vpop.permute.xlu0 %383
  %387 = vset.pattern.permute.xlu0 0
  %388 = vperm.xlu0 %387, %v354
  %v389 = vpop.permute.xlu0 %388
  %392 = vset.pattern.permute.xlu0 0
  %393 = vperm.xlu0 %392, %v355
  %v394 = vpop.permute.xlu0 %393
  %397 = vset.pattern.permute.xlu0 0
  %398 = vperm.xlu0 %397, %v356
  %v399 = vpop.permute.xlu0 %398
  %v401 = vadd.f32 %v377, %v384
  %v402 = vadd.f32 %v378, %v389
  %v403 = vadd.f32 %v379, %v394
  %v404 = vadd.f32 %v380, %v399
  %405 = vst.msk [vmem:[%s6] sm:$0xff] %vm72, %v401
  %406 = vst.msk [vmem:[%s6 + $0x8] sm:$0xff] %vm72, %v402
  %407 = vst.msk [vmem:[%s6 + $0x10] sm:$0xff] %vm72, %v403
  %408 = vst.msk [vmem:[%s6 + $0x18] sm:$0xff] %vm72, %v404
  %v409 = vmul.f32 %v228, %v360
  %v410 = vmul.f32 %v229, %v365
  %v411 = vmul.f32 %v230, %v370
  %v412 = vmul.f32 %v231, %v375
  %v413 = vadd.f32 %v409, %v384
  %v414 = vadd.f32 %v410, %v389
  %v415 = vadd.f32 %v411, %v394
  %v416 = vadd.f32 %v412, %v399
  %s417 = scalar_lea.vmem %s6, 32
  %418 = vst.msk [vmem:[%s417] sm:$0xff] %vm72, %v413
  %419 = vst.msk [vmem:[%s417 + $0x8] sm:$0xff] %vm72, %v414
  %420 = vst.msk [vmem:[%s417 + $0x10] sm:$0xff] %vm72, %v415
  %421 = vst.msk [vmem:[%s417 + $0x18] sm:$0xff] %vm72, %v416
  // Predicated region
  $region22: #{forward.6} parent=0 // pred_check
    _
  $region23: #{forward.6} parent=0 // pred_check_branch
    %423 = sbr.rel (0) target = $region25
  $region24: #{forward.6} parent=0 // pred_region
    _
  $region25: #{forward.6} parent=0 // pred_fallthru
    _
  // Predicated region
  $region26: #{forward.6} parent=0 // pred_check
    _
  $region27: #{forward.6} parent=0 // pred_check_branch
    %425 = sbr.rel (0) target = $region29
  $region28: #{forward.6} parent=0 // pred_region
    _
  $region29: #{forward.6} parent=0 // pred_fallthru
    _
  // Predicated region
  $region30: #{forward.6} parent=0 // pred_check
    _
  $region31: #{forward.6} parent=0 // pred_check_branch
    %427 = sbr.rel (0) target = $region33
  $region32: #{forward.6} parent=0 // pred_region
    _
  $region33: #{forward.6} parent=0 // pred_fallthru
    _
  // Predicated region
  $region34: #{forward.6} parent=0 // pred_check
    _
  $region35: #{forward.6} parent=0 // pred_check_branch
    %429 = sbr.rel (0) target = $region37
  $region36: #{forward.6} parent=0 // pred_region
    _
  $region37: #{forward.6} parent=0 // pred_fallthru
    _

// kernel: forward.7
$region0: #{forward.7}
  #allocation0 [shape = 'u32[]', space=smem, size = 0x4, offset = 0x4, fixed_abs, tag = 'smem constant byte address 0x4 - core index']
  #allocation1 [shape = 'u32[72,128]{1,0:T(1,128)}', space=vmem, size = 0x9000, scoped, tag = 'internal scratch']
  %s0 = inlined_call_operand.vmem [shape: f32[2,288,4], index: 0, kind: input, shape index: {}]
  %s1 = inlined_call_operand.vmem [shape: f32[64,288], index: 1, kind: input, shape index: {}]
  %s2 = inlined_call_operand.vmem [shape: f32[64,1], index: 2, kind: input, shape index: {}]
  %s3 = inlined_call_operand.vmem [shape: f32[64,1], index: 3, kind: input, shape index: {}]
  %s4 = inlined_call_operand.vmem [shape: f32[64,1], index: 4, kind: input, shape index: {}]
  %s5 = inlined_call_operand.vmem [shape: f32[64,8], index: 5, kind: input, shape index: {}]
  %s6 = inlined_call_operand.vmem [shape: f32[1,8], index: 6, kind: input, shape index: {}]
  %s7 = inlined_call_operand.vmem [shape: f32[2,64,4], index: 7, kind: output, shape index: {0}]
  %s8 = inlined_call_operand.hbm [shape: f32[2,8], index: 8, kind: output, shape index: {1}]
  %9 = xla_tuple %s7, %s8
  %s10 = sld [smem:[#allocation0]]
  $region46: #{forward.7} parent=0
    _
  %s12 = ssub.s32 1, %s10
  %s13 = scalar_select 0, %s12, %s10
  $region1: #{forward.7} parent=0
    #allocation2 [shape = 'u8[1024]{0}', space=vmem, size = 0x400, scoped, tag = 'output window, operand 1, single buffered']
    #allocation3 [shape = 's32[1]{0}', space=sflag, size = 0x4, scoped, tag = 'scoped memory for forward.7']
    %14 = vsyncpa [#allocation3], 0
    // Predicated region
    $region2: #{forward.7} parent=1 // pred_check
      _
    $region3: #{forward.7} parent=1 // pred_check_branch
      %16 = sbr.rel (0) target = $region5
    $region4: #{forward.7} parent=1 // pred_region
      _
    $region5: #{forward.7} parent=1 // pred_fallthru
      _
    // Predicated region
    $region6: #{forward.7} parent=1 // pred_check
      _
    $region7: #{forward.7} parent=1 // pred_check_branch
      %18 = sbr.rel (0) target = $region9
    $region8: #{forward.7} parent=1 // pred_region
      _
    $region9: #{forward.7} parent=1 // pred_fallthru
      _
    // Predicated region
    $region10: #{forward.7} parent=1 // pred_check
      _
    $region11: #{forward.7} parent=1 // pred_check_branch
      %20 = sbr.rel (0) target = $region13
    $region12: #{forward.7} parent=1 // pred_region
      _
    $region13: #{forward.7} parent=1 // pred_fallthru
      _
    // Predicated region
    $region14: #{forward.7} parent=1 // pred_check
      _
    $region15: #{forward.7} parent=1 // pred_check_branch
      %22 = sbr.rel (0) target = $region17
    $region16: #{forward.7} parent=1 // pred_region
      _
    $region17: #{forward.7} parent=1 // pred_fallthru
      _
    // Predicated region
    $region18: #{forward.7} parent=1 // pred_check
      _
    $region19: #{forward.7} parent=1 // pred_check_branch
      %24 = sbr.rel (0) target = $region21
    $region20: #{forward.7} parent=1 // pred_region
      _
    $region21: #{forward.7} parent=1 // pred_fallthru
      _
    // Predicated region
    $region22: #{forward.7} parent=1 // pred_check
      _
    $region23: #{forward.7} parent=1 // pred_check_branch
      %26 = sbr.rel (0) target = $region25
    $region24: #{forward.7} parent=1 // pred_region
      _
    $region25: #{forward.7} parent=1 // pred_fallthru
      _
    // Predicated region
    $region26: #{forward.7} parent=1 // pred_check
      _
    $region27: #{forward.7} parent=1 // pred_check_branch
      %28 = sbr.rel (0) target = $region29
    $region28: #{forward.7} parent=1 // pred_region
      _
    $region29: #{forward.7} parent=1 // pred_fallthru
      _
    %v29 = vld [vmem:[%s1] sm:$0xff]
    %v30 = vld [vmem:[%s1 + $0x8] sm:$0xff]
    %v31 = vld [vmem:[%s1 + $0x10] sm:$0xff]
    %v32 = vld [vmem:[%s1 + $0x18] sm:$0xff]
    %v33 = vld [vmem:[%s1 + $0x20] sm:$0xff]
    %v34 = vld [vmem:[%s1 + $0x28] sm:$0xff]
    %v35 = vld [vmem:[%s1 + $0x30] sm:$0xff]
    %v36 = vld [vmem:[%s1 + $0x38] sm:$0xff]
    %v37 = vld [vmem:[%s1 + $0x40] sm:$0xff]
    %v38 = vld [vmem:[%s1 + $0x48] sm:$0xff]
    %v39 = vld [vmem:[%s1 + $0x50] sm:$0xff]
    %v40 = vld [vmem:[%s1 + $0x58] sm:$0xff]
    %v41 = vld [vmem:[%s1 + $0x60] sm:$0xff]
    %v42 = vld [vmem:[%s1 + $0x68] sm:$0xff]
    %v43 = vld [vmem:[%s1 + $0x70] sm:$0xff]
    %v44 = vld [vmem:[%s1 + $0x78] sm:$0xff]
    %v45 = vld [vmem:[%s1 + $0x80] sm:$0xff]
    %v46 = vld [vmem:[%s1 + $0x88] sm:$0xff]
    %v47 = vld [vmem:[%s1 + $0x90] sm:$0xff]
    %v48 = vld [vmem:[%s1 + $0x98] sm:$0xff]
    %v49 = vld [vmem:[%s1 + $0xa0] sm:$0xff]
    %v50 = vld [vmem:[%s1 + $0xa8] sm:$0xff]
    %v51 = vld [vmem:[%s1 + $0xb0] sm:$0xff]
    %v52 = vld [vmem:[%s1 + $0xb8] sm:$0xff]
    %v53 = vld [vmem:[%s2] sm:$0xff]
    %v54 = vld [vmem:[%s2 + $0x8] sm:$0xff]
    %v55 = vld [vmem:[%s2 + $0x10] sm:$0xff]
    %v56 = vld [vmem:[%s2 + $0x18] sm:$0xff]
    %v57 = vld [vmem:[%s2 + $0x20] sm:$0xff]
    %v58 = vld [vmem:[%s2 + $0x28] sm:$0xff]
    %v59 = vld [vmem:[%s2 + $0x30] sm:$0xff]
    %v60 = vld [vmem:[%s2 + $0x38] sm:$0xff]
    %v61 = vld [vmem:[%s0] sm:$0xff]
    %v62 = vld [vmem:[%s0 + $0x8] sm:$0xff]
    %v63 = vld [vmem:[%s0 + $0x10] sm:$0xff]
    %v64 = vld [vmem:[%s0 + $0x18] sm:$0xff]
    %v65 = vld [vmem:[%s0 + $0x20] sm:$0xff]
    %v66 = vld [vmem:[%s0 + $0x28] sm:$0xff]
    %v67 = vld [vmem:[%s0 + $0x30] sm:$0xff]
    %v68 = vld [vmem:[%s0 + $0x38] sm:$0xff]
    %v69 = vld [vmem:[%s0 + $0x40] sm:$0xff]
    %v70 = vld [vmem:[%s0 + $0x48] sm:$0xff]
    %v71 = vld [vmem:[%s0 + $0x50] sm:$0xff]
    %v72 = vld [vmem:[%s0 + $0x58] sm:$0xff]
    %v73 = vld [vmem:[%s0 + $0x60] sm:$0xff]
    %v74 = vld [vmem:[%s0 + $0x68] sm:$0xff]
    %v75 = vld [vmem:[%s0 + $0x70] sm:$0xff]
    %v76 = vld [vmem:[%s0 + $0x78] sm:$0xff]
    %v77 = vld [vmem:[%s0 + $0x80] sm:$0xff]
    %v78 = vld [vmem:[%s0 + $0x88] sm:$0xff]
    %v79 = vld [vmem:[%s0 + $0x90] sm:$0xff]
    %v80 = vld [vmem:[%s0 + $0x98] sm:$0xff]
    %v81 = vld [vmem:[%s0 + $0xa0] sm:$0xff]
    %v82 = vld [vmem:[%s0 + $0xa8] sm:$0xff]
    %v83 = vld [vmem:[%s0 + $0xb0] sm:$0xff]
    %v84 = vld [vmem:[%s0 + $0xb8] sm:$0xff]
    %v85 = vld [vmem:[%s0 + $0xc0] sm:$0xff]
    %v86 = vld [vmem:[%s0 + $0xc8] sm:$0xff]
    %v87 = vld [vmem:[%s0 + $0xd0] sm:$0xff]
    %v88 = vld [vmem:[%s0 + $0xd8] sm:$0xff]
    %v89 = vld [vmem:[%s0 + $0xe0] sm:$0xff]
    %v90 = vld [vmem:[%s0 + $0xe8] sm:$0xff]
    %v91 = vld [vmem:[%s0 + $0xf0] sm:$0xff]
    %v92 = vld [vmem:[%s0 + $0xf8] sm:$0xff]
    %v93 = vld [vmem:[%s0 + $0x100] sm:$0xff]
    %v94 = vld [vmem:[%s0 + $0x108] sm:$0xff]
    %v95 = vld [vmem:[%s0 + $0x110] sm:$0xff]
    %v96 = vld [vmem:[%s0 + $0x118] sm:$0xff]
    %98 = vset.pattern.permute.xlu0 0
    %99 = vperm.xlu0 %98, %v53
    %v100 = vpop.permute.xlu0 %99
    %103 = vset.pattern.permute.xlu0 0
    %104 = vperm.xlu0 %103, %v54
    %v105 = vpop.permute.xlu0 %104
    %108 = vset.pattern.permute.xlu0 0
    %109 = vperm.xlu0 %108, %v55
    %v110 = vpop.permute.xlu0 %109
    %113 = vset.pattern.permute.xlu0 0
    %114 = vperm.xlu0 %113, %v56
    %v115 = vpop.permute.xlu0 %114
    %118 = vset.pattern.permute.xlu0 0
    %119 = vperm.xlu0 %118, %v57
    %v120 = vpop.permute.xlu0 %119
    %123 = vset.pattern.permute.xlu0 0
    %124 = vperm.xlu0 %123, %v58
    %v125 = vpop.permute.xlu0 %124
    %128 = vset.pattern.permute.xlu0 0
    %129 = vperm.xlu0 %128, %v59
    %v130 = vpop.permute.xlu0 %129
    %133 = vset.pattern.permute.xlu0 0
    %134 = vperm.xlu0 %133, %v60
    %v135 = vpop.permute.xlu0 %134
    %vm137 = vcmask 261120
    %v139 = vsel %vm137, %v31, 0
    %v142 = vsel %vm137, %v34, 0
    %v145 = vsel %vm137, %v37, 0
    %v148 = vsel %vm137, %v40, 0
    %v151 = vsel %vm137, %v43, 0
    %v154 = vsel %vm137, %v46, 0
    %v157 = vsel %vm137, %v49, 0
    %v160 = vsel %vm137, %v52, 0
    %162 = vmatpush.msra.mxu0 %v76
    %163 = vmatpush.msra.mxu0 %v75
    %164 = vmatpush.msra.mxu0 %v74
    %165 = vmatpush.msra.mxu0 %v73
    %166 = vmatpush.msra.mxu0 %v72
    %167 = vmatpush.msra.mxu0 %v71
    %168 = vmatpush.msra.mxu0 %v70
    %169 = vmatpush.msra.mxu0 %v69
    %170 = vmatpush.msra.mxu0 %v68
    %171 = vmatpush.msra.mxu0 %v67
    %172 = vmatpush.msra.mxu0 %v66
    %173 = vmatpush.msra.mxu0 %v65
    %174 = vmatpush.msra.mxu0 %v64
    %175 = vmatpush.msra.mxu0 %v63
    %176 = vmatpush.msra.mxu0 %v62
    %177 = vmatpush.msra.mxu0 %v61
    %178 = vmatmul.f32.gmra.mxu0 %v29
    %v179 = vpop.f32.mrf.mxu0
    %v180 = vadd.f32 %v100, %v179
    %181 = vmatmul.f32.gmra.mxu0 %v32
    %v182 = vpop.f32.mrf.mxu0
    %v183 = vadd.f32 %v105, %v182
    %184 = vmatmul.f32.gmra.mxu0 %v35
    %v185 = vpop.f32.mrf.mxu0
    %v186 = vadd.f32 %v110, %v185
    %187 = vmatmul.f32.gmra.mxu0 %v38
    %v188 = vpop.f32.mrf.mxu0
    %v189 = vadd.f32 %v115, %v188
    %190 = vmatmul.f32.gmra.mxu0 %v41
    %v191 = vpop.f32.mrf.mxu0
    %v192 = vadd.f32 %v120, %v191
    %193 = vmatmul.f32.gmra.mxu0 %v44
    %v194 = vpop.f32.mrf.mxu0
    %v195 = vadd.f32 %v125, %v194
    %196 = vmatmul.f32.gmra.mxu0 %v47
    %v197 = vpop.f32.mrf.mxu0
    %v198 = vadd.f32 %v130, %v197
    %199 = vmatmul.f32.gmra.mxu0 %v50
    %v200 = vpop.f32.mrf.mxu0
    %v201 = vadd.f32 %v135, %v200
    %202 = vdwg.mxu0
    %203 = vmatpush.msra.mxu0 %v92
    %204 = vmatpush.msra.mxu0 %v91
    %205 = vmatpush.msra.mxu0 %v90
    %206 = vmatpush.msra.mxu0 %v89
    %207 = vmatpush.msra.mxu0 %v88
    %208 = vmatpush.msra.mxu0 %v87
    %209 = vmatpush.msra.mxu0 %v86
    %210 = vmatpush.msra.mxu0 %v85
    %211 = vmatpush.msra.mxu0 %v84
    %212 = vmatpush.msra.mxu0 %v83
    %213 = vmatpush.msra.mxu0 %v82
    %214 = vmatpush.msra.mxu0 %v81
    %215 = vmatpush.msra.mxu0 %v80
    %216 = vmatpush.msra.mxu0 %v79
    %217 = vmatpush.msra.mxu0 %v78
    %218 = vmatpush.msra.mxu0 %v77
    %219 = vmatmul.f32.gmra.mxu0 %v30
    %v220 = vpop.f32.mrf.mxu0
    %v221 = vadd.f32 %v180, %v220
    %222 = vmatmul.f32.gmra.mxu0 %v33
    %v223 = vpop.f32.mrf.mxu0
    %v224 = vadd.f32 %v183, %v223
    %225 = vmatmul.f32.gmra.mxu0 %v36
    %v226 = vpop.f32.mrf.mxu0
    %v227 = vadd.f32 %v186, %v226
    %228 = vmatmul.f32.gmra.mxu0 %v39
    %v229 = vpop.f32.mrf.mxu0
    %v230 = vadd.f32 %v189, %v229
    %231 = vmatmul.f32.gmra.mxu0 %v42
    %v232 = vpop.f32.mrf.mxu0
    %v233 = vadd.f32 %v192, %v232
    %234 = vmatmul.f32.gmra.mxu0 %v45
    %v235 = vpop.f32.mrf.mxu0
    %v236 = vadd.f32 %v195, %v235
    %237 = vmatmul.f32.gmra.mxu0 %v48
    %v238 = vpop.f32.mrf.mxu0
    %v239 = vadd.f32 %v198, %v238
    %240 = vmatmul.f32.gmra.mxu0 %v51
    %v241 = vpop.f32.mrf.mxu0
    %v242 = vadd.f32 %v201, %v241
    %243 = vdwg.mxu0
    %244 = vmatpush.msra.mxu0 0.0
    %245 = vmatpush.msra.mxu0 0.0
    %246 = vmatpush.msra.mxu0 0.0
    %247 = vmatpush.msra.mxu0 0.0
    %248 = vmatpush.msra.mxu0 0.0
    %249 = vmatpush.msra.mxu0 0.0
    %250 = vmatpush.msra.mxu0 0.0
    %251 = vmatpush.msra.mxu0 0.0
    %252 = vmatpush.msra.mxu0 0.0
    %253 = vmatpush.msra.mxu0 0.0
    %254 = vmatpush.msra.mxu0 0.0
    %255 = vmatpush.msra.mxu0 0.0
    %256 = vmatpush.msra.mxu0 %v96
    %257 = vmatpush.msra.mxu0 %v95
    %258 = vmatpush.msra.mxu0 %v94
    %259 = vmatpush.msra.mxu0 %v93
    %260 = vmatmul.f32.gmra.mxu0 %v139
    %v261 = vpop.f32.mrf.mxu0
    %v262 = vadd.f32 %v221, %v261
    %263 = vmatmul.f32.gmra.mxu0 %v142
    %v264 = vpop.f32.mrf.mxu0
    %v265 = vadd.f32 %v224, %v264
    %266 = vmatmul.f32.gmra.mxu0 %v145
    %v267 = vpop.f32.mrf.mxu0
    %v268 = vadd.f32 %v227, %v267
    %269 = vmatmul.f32.gmra.mxu0 %v148
    %v270 = vpop.f32.mrf.mxu0
    %v271 = vadd.f32 %v230, %v270
    %272 = vmatmul.f32.gmra.mxu0 %v151
    %v273 = vpop.f32.mrf.mxu0
    %v274 = vadd.f32 %v233, %v273
    %275 = vmatmul.f32.gmra.mxu0 %v154
    %v276 = vpop.f32.mrf.mxu0
    %v277 = vadd.f32 %v236, %v276
    %278 = vmatmul.f32.gmra.mxu0 %v157
    %v279 = vpop.f32.mrf.mxu0
    %v280 = vadd.f32 %v239, %v279
    %281 = vmatmul.f32.gmra.mxu0 %v160
    %v282 = vpop.f32.mrf.mxu0
    %v283 = vadd.f32 %v242, %v282
    %284 = vdwg.mxu0
    %v285 = vmax.f32 %v262, 0.0
    %v286 = vmax.f32 %v265, 0.0
    %v287 = vmax.f32 %v268, 0.0
    %v288 = vmax.f32 %v271, 0.0
    %v289 = vmax.f32 %v274, 0.0
    %v290 = vmax.f32 %v277, 0.0
    %v291 = vmax.f32 %v280, 0.0
    %v292 = vmax.f32 %v283, 0.0
    %vm293 = vcmask 31744
    %294 = vst.msk [vmem:[%s7] sm:$0xff] %vm293, %v285
    %295 = vst.msk [vmem:[%s7 + $0x8] sm:$0xff] %vm293, %v286
    %296 = vst.msk [vmem:[%s7 + $0x10] sm:$0xff] %vm293, %v287
    %297 = vst.msk [vmem:[%s7 + $0x18] sm:$0xff] %vm293, %v288
    %298 = vst.msk [vmem:[%s7 + $0x20] sm:$0xff] %vm293, %v289
    %299 = vst.msk [vmem:[%s7 + $0x28] sm:$0xff] %vm293, %v290
    %300 = vst.msk [vmem:[%s7 + $0x30] sm:$0xff] %vm293, %v291
    %301 = vst.msk [vmem:[%s7 + $0x38] sm:$0xff] %vm293, %v292
    %s302 = scalar_lea.vmem %s0, 288
    %v303 = vld [vmem:[%s302] sm:$0xff]
    %v304 = vld [vmem:[%s302 + $0x8] sm:$0xff]
    %v305 = vld [vmem:[%s302 + $0x10] sm:$0xff]
    %v306 = vld [vmem:[%s302 + $0x18] sm:$0xff]
    %v307 = vld [vmem:[%s302 + $0x20] sm:$0xff]
    %v308 = vld [vmem:[%s302 + $0x28] sm:$0xff]
    %v309 = vld [vmem:[%s302 + $0x30] sm:$0xff]
    %v310 = vld [vmem:[%s302 + $0x38] sm:$0xff]
    %v311 = vld [vmem:[%s302 + $0x40] sm:$0xff]
    %v312 = vld [vmem:[%s302 + $0x48] sm:$0xff]
    %v313 = vld [vmem:[%s302 + $0x50] sm:$0xff]
    %v314 = vld [vmem:[%s302 + $0x58] sm:$0xff]
    %v315 = vld [vmem:[%s302 + $0x60] sm:$0xff]
    %v316 = vld [vmem:[%s302 + $0x68] sm:$0xff]
    %v317 = vld [vmem:[%s302 + $0x70] sm:$0xff]
    %v318 = vld [vmem:[%s302 + $0x78] sm:$0xff]
    %v319 = vld [vmem:[%s302 + $0x80] sm:$0xff]
    %v320 = vld [vmem:[%s302 + $0x88] sm:$0xff]
    %v321 = vld [vmem:[%s302 + $0x90] sm:$0xff]
    %v322 = vld [vmem:[%s302 + $0x98] sm:$0xff]
    %v323 = vld [vmem:[%s302 + $0xa0] sm:$0xff]
    %v324 = vld [vmem:[%s302 + $0xa8] sm:$0xff]
    %v325 = vld [vmem:[%s302 + $0xb0] sm:$0xff]
    %v326 = vld [vmem:[%s302 + $0xb8] sm:$0xff]
    %v327 = vld [vmem:[%s302 + $0xc0] sm:$0xff]
    %v328 = vld [vmem:[%s302 + $0xc8] sm:$0xff]
    %v329 = vld [vmem:[%s302 + $0xd0] sm:$0xff]
    %v330 = vld [vmem:[%s302 + $0xd8] sm:$0xff]
    %v331 = vld [vmem:[%s302 + $0xe0] sm:$0xff]
    %v332 = vld [vmem:[%s302 + $0xe8] sm:$0xff]
    %v333 = vld [vmem:[%s302 + $0xf0] sm:$0xff]
    %v334 = vld [vmem:[%s302 + $0xf8] sm:$0xff]
    %v335 = vld [vmem:[%s302 + $0x100] sm:$0xff]
    %v336 = vld [vmem:[%s302 + $0x108] sm:$0xff]
    %v337 = vld [vmem:[%s302 + $0x110] sm:$0xff]
    %v338 = vld [vmem:[%s302 + $0x118] sm:$0xff]
    %339 = vmatpush.msra.mxu0 %v318
    %340 = vmatpush.msra.mxu0 %v317
    %341 = vmatpush.msra.mxu0 %v316
    %342 = vmatpush.msra.mxu0 %v315
    %343 = vmatpush.msra.mxu0 %v314
    %344 = vmatpush.msra.mxu0 %v313
    %345 = vmatpush.msra.mxu0 %v312
    %346 = vmatpush.msra.mxu0 %v311
    %347 = vmatpush.msra.mxu0 %v310
    %348 = vmatpush.msra.mxu0 %v309
    %349 = vmatpush.msra.mxu0 %v308
    %350 = vmatpush.msra.mxu0 %v307
    %351 = vmatpush.msra.mxu0 %v306
    %352 = vmatpush.msra.mxu0 %v305
    %353 = vmatpush.msra.mxu0 %v304
    %354 = vmatpush.msra.mxu0 %v303
    %355 = vmatmul.f32.gmra.mxu0 %v29
    %v356 = vpop.f32.mrf.mxu0
    %v357 = vadd.f32 %v100, %v356
    %358 = vmatmul.f32.gmra.mxu0 %v32
    %v359 = vpop.f32.mrf.mxu0
    %v360 = vadd.f32 %v105, %v359
    %361 = vmatmul.f32.gmra.mxu0 %v35
    %v362 = vpop.f32.mrf.mxu0
    %v363 = vadd.f32 %v110, %v362
    %364 = vmatmul.f32.gmra.mxu0 %v38
    %v365 = vpop.f32.mrf.mxu0
    %v366 = vadd.f32 %v115, %v365
    %367 = vmatmul.f32.gmra.mxu0 %v41
    %v368 = vpop.f32.mrf.mxu0
    %v369 = vadd.f32 %v120, %v368
    %370 = vmatmul.f32.gmra.mxu0 %v44
    %v371 = vpop.f32.mrf.mxu0
    %v372 = vadd.f32 %v125, %v371
    %373 = vmatmul.f32.gmra.mxu0 %v47
    %v374 = vpop.f32.mrf.mxu0
    %v375 = vadd.f32 %v130, %v374
    %376 = vmatmul.f32.gmra.mxu0 %v50
    %v377 = vpop.f32.mrf.mxu0
    %v378 = vadd.f32 %v135, %v377
    %379 = vdwg.mxu0
    %380 = vmatpush.msra.mxu0 %v334
    %381 = vmatpush.msra.mxu0 %v333
    %382 = vmatpush.msra.mxu0 %v332
    %383 = vmatpush.msra.mxu0 %v331
    %384 = vmatpush.msra.mxu0 %v330
    %385 = vmatpush.msra.mxu0 %v329
    %386 = vmatpush.msra.mxu0 %v328
    %387 = vmatpush.msra.mxu0 %v327
    %388 = vmatpush.msra.mxu0 %v326
    %389 = vmatpush.msra.mxu0 %v325
    %390 = vmatpush.msra.mxu0 %v324
    %391 = vmatpush.msra.mxu0 %v323
    %392 = vmatpush.msra.mxu0 %v322
    %393 = vmatpush.msra.mxu0 %v321
    %394 = vmatpush.msra.mxu0 %v320
    %395 = vmatpush.msra.mxu0 %v319
    %396 = vmatmul.f32.gmra.mxu0 %v30
    %v397 = vpop.f32.mrf.mxu0
    %v398 = vadd.f32 %v357, %v397
    %399 = vmatmul.f32.gmra.mxu0 %v33
    %v400 = vpop.f32.mrf.mxu0
    %v401 = vadd.f32 %v360, %v400
    %402 = vmatmul.f32.gmra.mxu0 %v36
    %v403 = vpop.f32.mrf.mxu0
    %v404 = vadd.f32 %v363, %v403
    %405 = vmatmul.f32.gmra.mxu0 %v39
    %v406 = vpop.f32.mrf.mxu0
    %v407 = vadd.f32 %v366, %v406
    %408 = vmatmul.f32.gmra.mxu0 %v42
    %v409 = vpop.f32.mrf.mxu0
    %v410 = vadd.f32 %v369, %v409
    %411 = vmatmul.f32.gmra.mxu0 %v45
    %v412 = vpop.f32.mrf.mxu0
    %v413 = vadd.f32 %v372, %v412
    %414 = vmatmul.f32.gmra.mxu0 %v48
    %v415 = vpop.f32.mrf.mxu0
    %v416 = vadd.f32 %v375, %v415
    %417 = vmatmul.f32.gmra.mxu0 %v51
    %v418 = vpop.f32.mrf.mxu0
    %v419 = vadd.f32 %v378, %v418
    %420 = vdwg.mxu0
    %421 = vmatpush.msra.mxu0 0.0
    %422 = vmatpush.msra.mxu0 0.0
    %423 = vmatpush.msra.mxu0 0.0
    %424 = vmatpush.msra.mxu0 0.0
    %425 = vmatpush.msra.mxu0 0.0
    %426 = vmatpush.msra.mxu0 0.0
    %427 = vmatpush.msra.mxu0 0.0
    %428 = vmatpush.msra.mxu0 0.0
    %429 = vmatpush.msra.mxu0 0.0
    %430 = vmatpush.msra.mxu0 0.0
    %431 = vmatpush.msra.mxu0 0.0
    %432 = vmatpush.msra.mxu0 0.0
    %433 = vmatpush.msra.mxu0 %v338
    %434 = vmatpush.msra.mxu0 %v337
    %435 = vmatpush.msra.mxu0 %v336
    %436 = vmatpush.msra.mxu0 %v335
    %437 = vmatmul.f32.gmra.mxu0 %v139
    %v438 = vpop.f32.mrf.mxu0
    %v439 = vadd.f32 %v398, %v438
    %440 = vmatmul.f32.gmra.mxu0 %v142
    %v441 = vpop.f32.mrf.mxu0
    %v442 = vadd.f32 %v401, %v441
    %443 = vmatmul.f32.gmra.mxu0 %v145
    %v444 = vpop.f32.mrf.mxu0
    %v445 = vadd.f32 %v404, %v444
    %446 = vmatmul.f32.gmra.mxu0 %v148
    %v447 = vpop.f32.mrf.mxu0
    %v448 = vadd.f32 %v407, %v447
    %449 = vmatmul.f32.gmra.mxu0 %v151
    %v450 = vpop.f32.mrf.mxu0
    %v451 = vadd.f32 %v410, %v450
    %452 = vmatmul.f32.gmra.mxu0 %v154
    %v453 = vpop.f32.mrf.mxu0
    %v454 = vadd.f32 %v413, %v453
    %455 = vmatmul.f32.gmra.mxu0 %v157
    %v456 = vpop.f32.mrf.mxu0
    %v457 = vadd.f32 %v416, %v456
    %458 = vmatmul.f32.gmra.mxu0 %v160
    %v459 = vpop.f32.mrf.mxu0
    %v460 = vadd.f32 %v419, %v459
    %461 = vdwg.mxu0
    %v462 = vmax.f32 %v439, 0.0
    %v463 = vmax.f32 %v442, 0.0
    %v464 = vmax.f32 %v445, 0.0
    %v465 = vmax.f32 %v448, 0.0
    %v466 = vmax.f32 %v451, 0.0
    %v467 = vmax.f32 %v454, 0.0
    %v468 = vmax.f32 %v457, 0.0
    %v469 = vmax.f32 %v460, 0.0
    %s470 = scalar_lea.vmem %s7, 64
    %471 = vst.msk [vmem:[%s470] sm:$0xff] %vm293, %v462
    %472 = vst.msk [vmem:[%s470 + $0x8] sm:$0xff] %vm293, %v463
    %473 = vst.msk [vmem:[%s470 + $0x10] sm:$0xff] %vm293, %v464
    %474 = vst.msk [vmem:[%s470 + $0x18] sm:$0xff] %vm293, %v465
    %475 = vst.msk [vmem:[%s470 + $0x20] sm:$0xff] %vm293, %v466
    %476 = vst.msk [vmem:[%s470 + $0x28] sm:$0xff] %vm293, %v467
    %477 = vst.msk [vmem:[%s470 + $0x30] sm:$0xff] %vm293, %v468
    %478 = vst.msk [vmem:[%s470 + $0x38] sm:$0xff] %vm293, %v469
    %v479 = vadd.f32 %v285, %v462
    %v480 = vadd.f32 %v286, %v463
    %v481 = vadd.f32 %v287, %v464
    %v482 = vadd.f32 %v288, %v465
    %v483 = vadd.f32 %v289, %v466
    %v484 = vadd.f32 %v290, %v467
    %v485 = vadd.f32 %v291, %v468
    %v486 = vadd.f32 %v292, %v469
    %v487 = vsel %vm293, %v479, 0.0
    %488 = vadd.xlane.f32.xlu0 %v487
    %v489 = vpop.xlane.xlu0 %488
    %v490 = vsel %vm293, %v480, 0.0
    %491 = vadd.xlane.f32.xlu0 %v490
    %v492 = vpop.xlane.xlu0 %491
    %v493 = vsel %vm293, %v481, 0.0
    %494 = vadd.xlane.f32.xlu0 %v493
    %v495 = vpop.xlane.xlu0 %494
    %v496 = vsel %vm293, %v482, 0.0
    %497 = vadd.xlane.f32.xlu0 %v496
    %v498 = vpop.xlane.xlu0 %497
    %v499 = vsel %vm293, %v483, 0.0
    %500 = vadd.xlane.f32.xlu0 %v499
    %v501 = vpop.xlane.xlu0 %500
    %v502 = vsel %vm293, %v484, 0.0
    %503 = vadd.xlane.f32.xlu0 %v502
    %v504 = vpop.xlane.xlu0 %503
    %v505 = vsel %vm293, %v485, 0.0
    %506 = vadd.xlane.f32.xlu0 %v505
    %v507 = vpop.xlane.xlu0 %506
    %v508 = vsel %vm293, %v486, 0.0
    %509 = vadd.xlane.f32.xlu0 %v508
    %v510 = vpop.xlane.xlu0 %509
    %v511 = vmul.f32 %v489, 0.125
    %v512 = vmul.f32 %v492, 0.125
    %v513 = vmul.f32 %v495, 0.125
    %v514 = vmul.f32 %v498, 0.125
    %v515 = vmul.f32 %v501, 0.125
    %v516 = vmul.f32 %v504, 0.125
    %v517 = vmul.f32 %v507, 0.125
    %v518 = vmul.f32 %v510, 0.125
    %v519 = vsub.f32 %v285, %v511
    %v520 = vsub.f32 %v286, %v512
    %v521 = vsub.f32 %v287, %v513
    %v522 = vsub.f32 %v288, %v514
    %v523 = vsub.f32 %v289, %v515
    %v524 = vsub.f32 %v290, %v516
    %v525 = vsub.f32 %v291, %v517
    %v526 = vsub.f32 %v292, %v518
    %v527 = vmul.f32 %v519, %v519
    %v528 = vmul.f32 %v520, %v520
    %v529 = vmul.f32 %v521, %v521
    %v530 = vmul.f32 %v522, %v522
    %v531 = vmul.f32 %v523, %v523
    %v532 = vmul.f32 %v524, %v524
    %v533 = vmul.f32 %v525, %v525
    %v534 = vmul.f32 %v526, %v526
    %v535 = vsub.f32 %v462, %v511
    %v536 = vsub.f32 %v463, %v512
    %v537 = vsub.f32 %v464, %v513
    %v538 = vsub.f32 %v465, %v514
    %v539 = vsub.f32 %v466, %v515
    %v540 = vsub.f32 %v467, %v516
    %v541 = vsub.f32 %v468, %v517
    %v542 = vsub.f32 %v469, %v518
    %v543 = vmul.f32 %v535, %v535
    %v544 = vmul.f32 %v536, %v536
    %v545 = vmul.f32 %v537, %v537
    %v546 = vmul.f32 %v538, %v538
    %v547 = vmul.f32 %v539, %v539
    %v548 = vmul.f32 %v540, %v540
    %v549 = vmul.f32 %v541, %v541
    %v550 = vmul.f32 %v542, %v542
    %v551 = vadd.f32 %v527, %v543
    %v552 = vadd.f32 %v528, %v544
    %v553 = vadd.f32 %v529, %v545
    %v554 = vadd.f32 %v530, %v546
    %v555 = vadd.f32 %v531, %v547
    %v556 = vadd.f32 %v532, %v548
    %v557 = vadd.f32 %v533, %v549
    %v558 = vadd.f32 %v534, %v550
    %v559 = vsel %vm293, %v551, 0.0
    %560 = vadd.xlane.f32.xlu0 %v559
    %v561 = vpop.xlane.xlu0 %560
    %v562 = vsel %vm293, %v552, 0.0
    %563 = vadd.xlane.f32.xlu0 %v562
    %v564 = vpop.xlane.xlu0 %563
    %v565 = vsel %vm293, %v553, 0.0
    %566 = vadd.xlane.f32.xlu0 %v565
    %v567 = vpop.xlane.xlu0 %566
    %v568 = vsel %vm293, %v554, 0.0
    %569 = vadd.xlane.f32.xlu0 %v568
    %v570 = vpop.xlane.xlu0 %569
    %v571 = vsel %vm293, %v555, 0.0
    %572 = vadd.xlane.f32.xlu0 %v571
    %v573 = vpop.xlane.xlu0 %572
    %v574 = vsel %vm293, %v556, 0.0
    %575 = vadd.xlane.f32.xlu0 %v574
    %v576 = vpop.xlane.xlu0 %575
    %v577 = vsel %vm293, %v557, 0.0
    %578 = vadd.xlane.f32.xlu0 %v577
    %v579 = vpop.xlane.xlu0 %578
    %v580 = vsel %vm293, %v558, 0.0
    %581 = vadd.xlane.f32.xlu0 %v580
    %v582 = vpop.xlane.xlu0 %581
    %v583 = vmul.f32 %v561, 0.125
    %v584 = vmul.f32 %v564, 0.125
    %v585 = vmul.f32 %v567, 0.125
    %v586 = vmul.f32 %v570, 0.125
    %v587 = vmul.f32 %v573, 0.125
    %v588 = vmul.f32 %v576, 0.125
    %v589 = vmul.f32 %v579, 0.125
    %v590 = vmul.f32 %v582, 0.125
    %v591 = vadd.f32 %v583, 1e-05
    %v592 = vadd.f32 %v584, 1e-05
    %v593 = vadd.f32 %v585, 1e-05
    %v594 = vadd.f32 %v586, 1e-05
    %v595 = vadd.f32 %v587, 1e-05
    %v596 = vadd.f32 %v588, 1e-05
    %v597 = vadd.f32 %v589, 1e-05
    %v598 = vadd.f32 %v590, 1e-05
    %v599 = vrsqrt.pop %v591
    %v600 = vmul.f32 %v599, %v591
    %v601 = vmul.f32 %v600, %v599
    %v602 = vmul.f32 0.5, %v601
    %v603 = vsub.f32 1.5, %v602
    %v604 = vmul.f32 %v599, %v603
    %vm605 = vweird.f32 %v591
    %vm606 = vweird.f32 %v599
    %vm607 = vmor %vm605, %vm606
    %v608 = vsel %vm607, %v599, %v604
    %v609 = vrsqrt.pop %v592
    %v610 = vmul.f32 %v609, %v592
    %v611 = vmul.f32 %v610, %v609
    %v612 = vmul.f32 0.5, %v611
    %v613 = vsub.f32 1.5, %v612
    %v614 = vmul.f32 %v609, %v613
    %vm615 = vweird.f32 %v592
    %vm616 = vweird.f32 %v609
    %vm617 = vmor %vm615, %vm616
    %v618 = vsel %vm617, %v609, %v614
    %v619 = vrsqrt.pop %v593
    %v620 = vmul.f32 %v619, %v593
    %v621 = vmul.f32 %v620, %v619
    %v622 = vmul.f32 0.5, %v621
    %v623 = vsub.f32 1.5, %v622
    %v624 = vmul.f32 %v619, %v623
    %vm625 = vweird.f32 %v593
    %vm626 = vweird.f32 %v619
    %vm627 = vmor %vm625, %vm626
    %v628 = vsel %vm627, %v619, %v624
    %v629 = vrsqrt.pop %v594
    %v630 = vmul.f32 %v629, %v594
    %v631 = vmul.f32 %v630, %v629
    %v632 = vmul.f32 0.5, %v631
    %v633 = vsub.f32 1.5, %v632
    %v634 = vmul.f32 %v629, %v633
    %vm635 = vweird.f32 %v594
    %vm636 = vweird.f32 %v629
    %vm637 = vmor %vm635, %vm636
    %v638 = vsel %vm637, %v629, %v634
    %v639 = vrsqrt.pop %v595
    %v640 = vmul.f32 %v639, %v595
    %v641 = vmul.f32 %v640, %v639
    %v642 = vmul.f32 0.5, %v641
    %v643 = vsub.f32 1.5, %v642
    %v644 = vmul.f32 %v639, %v643
    %vm645 = vweird.f32 %v595
    %vm646 = vweird.f32 %v639
    %vm647 = vmor %vm645, %vm646
    %v648 = vsel %vm647, %v639, %v644
    %v649 = vrsqrt.pop %v596
    %v650 = vmul.f32 %v649, %v596
    %v651 = vmul.f32 %v650, %v649
    %v652 = vmul.f32 0.5, %v651
    %v653 = vsub.f32 1.5, %v652
    %v654 = vmul.f32 %v649, %v653
    %vm655 = vweird.f32 %v596
    %vm656 = vweird.f32 %v649
    %vm657 = vmor %vm655, %vm656
    %v658 = vsel %vm657, %v649, %v654
    %v659 = vrsqrt.pop %v597
    %v660 = vmul.f32 %v659, %v597
    %v661 = vmul.f32 %v660, %v659
    %v662 = vmul.f32 0.5, %v661
    %v663 = vsub.f32 1.5, %v662
    %v664 = vmul.f32 %v659, %v663
    %vm665 = vweird.f32 %v597
    %vm666 = vweird.f32 %v659
    %vm667 = vmor %vm665, %vm666
    %v668 = vsel %vm667, %v659, %v664
    %v669 = vrsqrt.pop %v598
    %v670 = vmul.f32 %v669, %v598
    %v671 = vmul.f32 %v670, %v669
    %v672 = vmul.f32 0.5, %v671
    %v673 = vsub.f32 1.5, %v672
    %v674 = vmul.f32 %v669, %v673
    %vm675 = vweird.f32 %v598
    %vm676 = vweird.f32 %v669
    %vm677 = vmor %vm675, %vm676
    %v678 = vsel %vm677, %v669, %v674
    %v679 = vld [vmem:[%s3] sm:$0xff]
    %v680 = vld [vmem:[%s3 + $0x8] sm:$0xff]
    %v681 = vld [vmem:[%s3 + $0x10] sm:$0xff]
    %v682 = vld [vmem:[%s3 + $0x18] sm:$0xff]
    %v683 = vld [vmem:[%s3 + $0x20] sm:$0xff]
    %v684 = vld [vmem:[%s3 + $0x28] sm:$0xff]
    %v685 = vld [vmem:[%s3 + $0x30] sm:$0xff]
    %v686 = vld [vmem:[%s3 + $0x38] sm:$0xff]
    %v687 = vmul.f32 %v608, %v679
    %v688 = vmul.f32 %v618, %v680
    %v689 = vmul.f32 %v628, %v681
    %v690 = vmul.f32 %v638, %v682
    %v691 = vmul.f32 %v648, %v683
    %v692 = vmul.f32 %v658, %v684
    %v693 = vmul.f32 %v668, %v685
    %v694 = vmul.f32 %v678, %v686
    %v695 = vld [vmem:[%s4] sm:$0xff]
    %v696 = vld [vmem:[%s4 + $0x8] sm:$0xff]
    %v697 = vld [vmem:[%s4 + $0x10] sm:$0xff]
    %v698 = vld [vmem:[%s4 + $0x18] sm:$0xff]
    %v699 = vld [vmem:[%s4 + $0x20] sm:$0xff]
    %v700 = vld [vmem:[%s4 + $0x28] sm:$0xff]
    %v701 = vld [vmem:[%s4 + $0x30] sm:$0xff]
    %v702 = vld [vmem:[%s4 + $0x38] sm:$0xff]
    %v703 = vmul.f32 %v511, %v687
    %v704 = vmul.f32 %v512, %v688
    %v705 = vmul.f32 %v513, %v689
    %v706 = vmul.f32 %v514, %v690
    %v707 = vmul.f32 %v515, %v691
    %v708 = vmul.f32 %v516, %v692
    %v709 = vmul.f32 %v517, %v693
    %v710 = vmul.f32 %v518, %v694
    %v711 = vsub.f32 %v695, %v703
    %v712 = vsub.f32 %v696, %v704
    %v713 = vsub.f32 %v697, %v705
    %v714 = vsub.f32 %v698, %v706
    %v715 = vsub.f32 %v699, %v707
    %v716 = vsub.f32 %v700, %v708
    %v717 = vsub.f32 %v701, %v709
    %v718 = vsub.f32 %v702, %v710
    %720 = vset.pattern.permute.xlu0 0
    %721 = vperm.xlu0 %720, %v687
    %v722 = vpop.permute.xlu0 %721
    %725 = vset.pattern.permute.xlu0 0
    %726 = vperm.xlu0 %725, %v688
    %v727 = vpop.permute.xlu0 %726
    %730 = vset.pattern.permute.xlu0 0
    %731 = vperm.xlu0 %730, %v689
    %v732 = vpop.permute.xlu0 %731
    %735 = vset.pattern.permute.xlu0 0
    %736 = vperm.xlu0 %735, %v690
    %v737 = vpop.permute.xlu0 %736
    %740 = vset.pattern.permute.xlu0 0
    %741 = vperm.xlu0 %740, %v691
    %v742 = vpop.permute.xlu0 %741
    %745 = vset.pattern.permute.xlu0 0
    %746 = vperm.xlu0 %745, %v692
    %v747 = vpop.permute.xlu0 %746
    %750 = vset.pattern.permute.xlu0 0
    %751 = vperm.xlu0 %750, %v693
    %v752 = vpop.permute.xlu0 %751
    %755 = vset.pattern.permute.xlu0 0
    %756 = vperm.xlu0 %755, %v694
    %v757 = vpop.permute.xlu0 %756
    %v759 = vmul.f32 %v285, %v722
    %v760 = vmul.f32 %v286, %v727
    %v761 = vmul.f32 %v287, %v732
    %v762 = vmul.f32 %v288, %v737
    %v763 = vmul.f32 %v289, %v742
    %v764 = vmul.f32 %v290, %v747
    %v765 = vmul.f32 %v291, %v752
    %v766 = vmul.f32 %v292, %v757
    %768 = vset.pattern.permute.xlu0 0
    %769 = vperm.xlu0 %768, %v711
    %v770 = vpop.permute.xlu0 %769
    %773 = vset.pattern.permute.xlu0 0
    %774 = vperm.xlu0 %773, %v712
    %v775 = vpop.permute.xlu0 %774
    %778 = vset.pattern.permute.xlu0 0
    %779 = vperm.xlu0 %778, %v713
    %v780 = vpop.permute.xlu0 %779
    %783 = vset.pattern.permute.xlu0 0
    %784 = vperm.xlu0 %783, %v714
    %v785 = vpop.permute.xlu0 %784
    %788 = vset.pattern.permute.xlu0 0
    %789 = vperm.xlu0 %788, %v715
    %v790 = vpop.permute.xlu0 %789
    %793 = vset.pattern.permute.xlu0 0
    %794 = vperm.xlu0 %793, %v716
    %v795 = vpop.permute.xlu0 %794
    %798 = vset.pattern.permute.xlu0 0
    %799 = vperm.xlu0 %798, %v717
    %v800 = vpop.permute.xlu0 %799
    %803 = vset.pattern.permute.xlu0 0
    %804 = vperm.xlu0 %803, %v718
    %v805 = vpop.permute.xlu0 %804
    %v807 = vadd.f32 %v759, %v770
    %v808 = vadd.f32 %v760, %v775
    %v809 = vadd.f32 %v761, %v780
    %v810 = vadd.f32 %v762, %v785
    %v811 = vadd.f32 %v763, %v790
    %v812 = vadd.f32 %v764, %v795
    %v813 = vadd.f32 %v765, %v800
    %v814 = vadd.f32 %v766, %v805
    %v815 = vsel %vm293, %v807, 0.0
    %816 = vadd.xlane.f32.xlu0 %v815
    %v817 = vpop.xlane.xlu0 %816
    %v818 = vsel %vm293, %v808, 0.0
    %819 = vadd.xlane.f32.xlu0 %v818
    %v820 = vpop.xlane.xlu0 %819
    %v821 = vsel %vm293, %v809, 0.0
    %822 = vadd.xlane.f32.xlu0 %v821
    %v823 = vpop.xlane.xlu0 %822
    %v824 = vsel %vm293, %v810, 0.0
    %825 = vadd.xlane.f32.xlu0 %v824
    %v826 = vpop.xlane.xlu0 %825
    %v827 = vsel %vm293, %v811, 0.0
    %828 = vadd.xlane.f32.xlu0 %v827
    %v829 = vpop.xlane.xlu0 %828
    %v830 = vsel %vm293, %v812, 0.0
    %831 = vadd.xlane.f32.xlu0 %v830
    %v832 = vpop.xlane.xlu0 %831
    %v833 = vsel %vm293, %v813, 0.0
    %834 = vadd.xlane.f32.xlu0 %v833
    %v835 = vpop.xlane.xlu0 %834
    %v836 = vsel %vm293, %v814, 0.0
    %837 = vadd.xlane.f32.xlu0 %v836
    %v838 = vpop.xlane.xlu0 %837
    %v839 = vrcp.pop 4.0
    %v840 = vmul.f32 4.0, %v839
    %v841 = vsub.f32 1.0, %v840
    %v842 = vmul.f32 %v839, %v841
    %v843 = vadd.f32 %v839, %v842
    %vm844 = vweird.f32 %v839
    %v845 = vsel %vm844, %v839, %v843
    %v846 = vmul.f32 %v817, %v845
    %v847 = vmul.f32 %v820, %v845
    %v848 = vmul.f32 %v823, %v845
    %v849 = vmul.f32 %v826, %v845
    %v850 = vmul.f32 %v829, %v845
    %v851 = vmul.f32 %v832, %v845
    %v852 = vmul.f32 %v835, %v845
    %v853 = vmul.f32 %v838, %v845
    %v854 = vmul.f32 %v462, %v722
    %v855 = vmul.f32 %v463, %v727
    %v856 = vmul.f32 %v464, %v732
    %v857 = vmul.f32 %v465, %v737
    %v858 = vmul.f32 %v466, %v742
    %v859 = vmul.f32 %v467, %v747
    %v860 = vmul.f32 %v468, %v752
    %v861 = vmul.f32 %v469, %v757
    %v862 = vadd.f32 %v854, %v770
    %v863 = vadd.f32 %v855, %v775
    %v864 = vadd.f32 %v856, %v780
    %v865 = vadd.f32 %v857, %v785
    %v866 = vadd.f32 %v858, %v790
    %v867 = vadd.f32 %v859, %v795
    %v868 = vadd.f32 %v860, %v800
    %v869 = vadd.f32 %v861, %v805
    %v870 = vsel %vm293, %v862, 0.0
    %871 = vadd.xlane.f32.xlu0 %v870
    %v872 = vpop.xlane.xlu0 %871
    %v873 = vsel %vm293, %v863, 0.0
    %874 = vadd.xlane.f32.xlu0 %v873
    %v875 = vpop.xlane.xlu0 %874
    %v876 = vsel %vm293, %v864, 0.0
    %877 = vadd.xlane.f32.xlu0 %v876
    %v878 = vpop.xlane.xlu0 %877
    %v879 = vsel %vm293, %v865, 0.0
    %880 = vadd.xlane.f32.xlu0 %v879
    %v881 = vpop.xlane.xlu0 %880
    %v882 = vsel %vm293, %v866, 0.0
    %883 = vadd.xlane.f32.xlu0 %v882
    %v884 = vpop.xlane.xlu0 %883
    %v885 = vsel %vm293, %v867, 0.0
    %886 = vadd.xlane.f32.xlu0 %v885
    %v887 = vpop.xlane.xlu0 %886
    %v888 = vsel %vm293, %v868, 0.0
    %889 = vadd.xlane.f32.xlu0 %v888
    %v890 = vpop.xlane.xlu0 %889
    %v891 = vsel %vm293, %v869, 0.0
    %892 = vadd.xlane.f32.xlu0 %v891
    %v893 = vpop.xlane.xlu0 %892
    %v894 = vmul.f32 %v872, %v845
    %v895 = vmul.f32 %v875, %v845
    %v896 = vmul.f32 %v878, %v845
    %v897 = vmul.f32 %v881, %v845
    %v898 = vmul.f32 %v884, %v845
    %v899 = vmul.f32 %v887, %v845
    %v900 = vmul.f32 %v890, %v845
    %v901 = vmul.f32 %v893, %v845
    %vm902 = vcmask 7168
    %v903 = vsel %vm902, %v846, %v894
    %v904 = vsel %vm902, %v847, %v895
    %v905 = vsel %vm902, %v848, %v896
    %v906 = vsel %vm902, %v849, %v897
    %v907 = vsel %vm902, %v850, %v898
    %v908 = vsel %vm902, %v851, %v899
    %v909 = vsel %vm902, %v852, %v900
    %v910 = vsel %vm902, %v853, %v901
    %911 = vxpose.xlu0.b32.start [1/16] %v903, 128
    %912 = vxpose.xlu0.b32.cont [2/16] %v904, 128
    %913 = vxpose.xlu0.b32.cont [3/16] %v905, 128
    %914 = vxpose.xlu0.b32.cont [4/16] %v906, 128
    %915 = vxpose.xlu0.b32.cont [5/16] %v907, 128
    %916 = vxpose.xlu0.b32.cont [6/16] %v908, 128
    %917 = vxpose.xlu0.b32.cont [7/16] %v909, 128
    %918 = vxpose.xlu0.b32.cont [8/16] %v910, 128
    %919 = vxpose.xlu0.b32.cont [9/16] 0.0, 128
    %920 = vxpose.xlu0.b32.cont [10/16] 0.0, 128
    %921 = vxpose.xlu0.b32.cont [11/16] 0.0, 128
    %922 = vxpose.xlu0.b32.cont [12/16] 0.0, 128
    %923 = vxpose.xlu0.b32.cont [13/16] 0.0, 128
    %924 = vxpose.xlu0.b32.cont [14/16] 0.0, 128
    %925 = vxpose.xlu0.b32.cont [15/16] 0.0, 128
    %926 = vxpose.xlu0.b32.end [16/16] 0.0, 128
    %v927 = vpop.trf.xlu0
    %v928 = vpop.trf.xlu0
    %v929 = vpop.trf.xlu0
    %v930 = vpop.trf.xlu0
    %v931 = vpop.trf.xlu0
    %v932 = vpop.trf.xlu0
    %v933 = vpop.trf.xlu0
    %v934 = vpop.trf.xlu0
    %v935 = vpop.trf.xlu0
    %v936 = vpop.trf.xlu0
    %v937 = vpop.trf.xlu0
    %v938 = vpop.trf.xlu0
    %v939 = vpop.trf.xlu0
    %v940 = vpop.trf.xlu0
    %v941 = vpop.trf.xlu0
    %v942 = vpop.trf.xlu0
    %v943 = vld [vmem:[%s5] sm:$0xff]
    %v944 = vld [vmem:[%s5 + $0x8] sm:$0xff]
    %v945 = vld [vmem:[%s5 + $0x10] sm:$0xff]
    %v946 = vld [vmem:[%s5 + $0x18] sm:$0xff]
    %v947 = vld [vmem:[%s5 + $0x20] sm:$0xff]
    %v948 = vld [vmem:[%s5 + $0x28] sm:$0xff]
    %v949 = vld [vmem:[%s5 + $0x30] sm:$0xff]
    %v950 = vld [vmem:[%s5 + $0x38] sm:$0xff]
    %v951 = vld [vmem:[%s6] sm:$0x1]
    %v953 = vperm.slane %v951, 0
    %vm955 = vcmask 523264
    %v957 = vsel %vm955, %v927, 0
    %959 = vmatpush.msra.mxu0 0.0
    %960 = vmatpush.msra.mxu0 0.0
    %961 = vmatpush.msra.mxu0 0.0
    %962 = vmatpush.msra.mxu0 0.0
    %963 = vmatpush.msra.mxu0 0.0
    %964 = vmatpush.msra.mxu0 0.0
    %965 = vmatpush.msra.mxu0 0.0
    %966 = vmatpush.msra.mxu0 0.0
    %967 = vmatpush.msra.mxu0 %v950
    %968 = vmatpush.msra.mxu0 %v949
    %969 = vmatpush.msra.mxu0 %v948
    %970 = vmatpush.msra.mxu0 %v947
    %971 = vmatpush.msra.mxu0 %v946
    %972 = vmatpush.msra.mxu0 %v945
    %973 = vmatpush.msra.mxu0 %v944
    %974 = vmatpush.msra.mxu0 %v943
    %975 = vmatmul.f32.gmra.mxu0 %v957
    %v976 = vpop.f32.mrf.mxu0
    %v977 = vadd.f32 %v953, %v976
    %978 = vdwg.mxu0
    %vm979 = vcmask 58368
    %980 = vst.msk [vmem:[#allocation2] sm:$0x3] %vm979, %v977
    // Predicated region
    $region30: #{forward.7} parent=1 // pred_check
      _
    $region31: #{forward.7} parent=1 // pred_check_branch
      %982 = sbr.rel (0) target = $region33
    $region32: #{forward.7} parent=1 // pred_region
      _
    $region33: #{forward.7} parent=1 // pred_fallthru
      _
    // Predicated region
    $region34: #{forward.7} parent=1 // pred_check
      _
    $region35: #{forward.7} parent=1 // pred_check_branch
      %984 = sbr.rel (0) target = $region37
    $region36: #{forward.7} parent=1 // pred_region
      %986 = vsyncadd [#allocation3], 0
      %s988 = sshll.u32 [#allocation2], 4
      %s989 = int_to_ptr.vmem [resolvable:$true] %s988
      %s990 = sshll.u32 %s8, 4
      %s991 = int_to_ptr.hbm [resolvable:$true] %s990
      %993 = dma.vmem_to_hbm [thread:$0]  %s989, 32, %s991, [#allocation3]
    $region37: #{forward.7} parent=1 // pred_fallthru
      _
    // Predicated region
    $region38: #{forward.7} parent=1 // pred_check
      _
    $region39: #{forward.7} parent=1 // pred_check_branch
      %995 = sbr.rel (0) target = $region41
    $region40: #{forward.7} parent=1 // pred_region
      _
    $region41: #{forward.7} parent=1 // pred_fallthru
      _
    // Predicated region
    $region42: #{forward.7} parent=1 // pred_check
      _
    $region43: #{forward.7} parent=1 // pred_check_branch
      %997 = sbr.rel (0) target = $region45
    $region44: #{forward.7} parent=1 // pred_region
      %999 = dma.done [#allocation3], 32
    $region45: #{forward.7} parent=1 // pred_fallthru
      _
    %1000 = vsyncpa [#allocation3], 1

</llo_original>
